<compile_context>
chip_gen: v7x
topology: tpu7x:2x2x1
jax: 0.10.0
libtpu: 0.0.40
codegen_flags: <defaults>
</compile_context>

<pallas_src>
import functools

import jax
import jax.numpy as jnp
from jax.experimental import pallas as pl
from jax.experimental.pallas import tpu as pltpu

# Safe scoped-VMEM budget on every generation (v5e/v6e 128 MiB, v7x 64 MiB);
# all per-step working sets below are kept under ~8 MiB.
_VMEM_LIMIT = 32 * 1024 * 1024


def _round_up(x, m):
    return ((x + m - 1) // m) * m


def _pick_tn(cout):
    """Lane-dense output-column tile: 256 fills the v6e/v7x MXU, else 128."""
    tn = 256 if cout % 256 == 0 else 128
    assert cout % tn == 0, (cout, tn)
    return tn


# --------------------------------------------------------------------------
# Pallas kernels
# --------------------------------------------------------------------------
def _matmul_bn_kernel(x_ref, w_ref, s_ref, b_ref, o_ref, *, relu):
    # (tm, K) @ (K, tn) on the MXU (bf16 in, f32 acc), fused BN scale/bias.
    y = jnp.dot(x_ref[...], w_ref[...], preferred_element_type=jnp.float32)
    y = y * s_ref[...] + b_ref[...]
    if relu:
        y = jnp.maximum(y, 0.0)
    o_ref[...] = y.astype(o_ref.dtype)


def _matmul_bn_res_kernel(x_ref, w_ref, s_ref, b_ref, r_ref, o_ref):
    # Same as above plus fused residual add + ReLU (bottleneck tail).
    y = jnp.dot(x_ref[...], w_ref[...], preferred_element_type=jnp.float32)
    y = y * s_ref[...] + b_ref[...] + r_ref[...].astype(jnp.float32)
    o_ref[...] = jnp.maximum(y, 0.0).astype(o_ref.dtype)


def _conv3x3_kernel(ph_ref, w_ref, s_ref, b_ref, o_ref, *, taps):
    # Fused 3x3 conv on one halo'd row tile of the phase-packed activation.
    #   ph_ref: (1, phases, tm + dmax, Cin)   w_ref: (9, Cin, tn)
    #   o_ref : (tm, tn)
    # 9 tap matmuls accumulate in f32 on the MXU, BN + ReLU in the epilogue.
    mw = o_ref.shape[0]
    t0, p0, d0 = taps[0]
    acc = jnp.dot(ph_ref[0, p0, d0:d0 + mw, :], w_ref[t0],
                  preferred_element_type=jnp.float32)
    for t, p, dl in taps[1:]:
        acc = acc + jnp.dot(ph_ref[0, p, dl:dl + mw, :], w_ref[t],
                            preferred_element_type=jnp.float32)
    y = acc * s_ref[...] + b_ref[...]
    o_ref[...] = jnp.maximum(y, 0.0).astype(o_ref.dtype)


def _maxpool_kernel(ph_ref, o_ref, *, taps):
    # 3x3/s2 max pool on one halo'd row tile: 9 shifted row slices, max-reduce.
    mw = o_ref.shape[0]
    _, p0, d0 = taps[0]
    acc = ph_ref[0, p0, d0:d0 + mw, :]
    for _, p, dl in taps[1:]:
        acc = jnp.maximum(acc, ph_ref[0, p, dl:dl + mw, :])
    o_ref[...] = acc


# --------------------------------------------------------------------------
# Wrappers
# --------------------------------------------------------------------------
def matmul_bn(x, w, scale, bias, *, relu, residual=None,
              out_dtype=jnp.bfloat16):
    """x: (M, K) bf16, w: (K, Cout) bf16, scale/bias: (1, Cout) f32."""
    M, K = x.shape
    Cout = w.shape[1]
    tn = _pick_tn(Cout)
    tm = min(256, _round_up(M, 8))          # 256x256 fills the v6e/v7x MXU
    Mp = _round_up(M, tm)
    if Mp != M:
        x = jnp.pad(x, ((0, Mp - M), (0, 0)))
        if residual is not None:
            residual = jnp.pad(residual, ((0, Mp - M), (0, 0)))
    grid = (Mp // tm, Cout // tn)

    in_specs = [
        pl.BlockSpec((tm, K), lambda i, j: (i, 0)),
        pl.BlockSpec((K, tn), lambda i, j: (0, j)),
        pl.BlockSpec((1, tn), lambda i, j: (0, j)),
        pl.BlockSpec((1, tn), lambda i, j: (0, j)),
    ]
    args = [x, w, scale, bias]
    if residual is None:
        kernel = functools.partial(_matmul_bn_kernel, relu=relu)
    else:
        kernel = _matmul_bn_res_kernel
        in_specs.append(pl.BlockSpec((tm, tn), lambda i, j: (i, j)))
        args.append(residual)

    out = pl.pallas_call(
        kernel,
        out_shape=jax.ShapeDtypeStruct((Mp, Cout), out_dtype),
        grid=grid,
        in_specs=in_specs,
        out_specs=pl.BlockSpec((tm, tn), lambda i, j: (i, j)),
        compiler_params=pltpu.CompilerParams(
            dimension_semantics=("parallel", "parallel"),
            vmem_limit_bytes=_VMEM_LIMIT),
    )(*args)
    return out if Mp == M else out[:M]


def _phase_pack_tiled(x, k, stride, pad, fill, tm):
    """Repack a padded NHWC activation into stride-phase planes with flattened
    spatial rows, then into overlapping (halo'd) row tiles so every kxk tap is
    a contiguous row slice of one VMEM-resident block.

    Returns (pht, taps, tm_eff, n_tiles, Mw, (N, Ha, Wa, Ho, Wo)) where
      pht  : (n_tiles, stride*stride, tm_eff + dmax, C)
      taps : tuple of (tap_index, phase_index, row_delta)
      Mw   : N*Ha*Wa wide output rows; valid outputs are [:Ho, :Wo].
    """
    N, H, W, C = x.shape
    s = stride
    Hp, Wp = H + 2 * pad, W + 2 * pad
    Ho, Wo = (Hp - k) // s + 1, (Wp - k) // s + 1
    d = (k - 1) // s
    Ha, Wa = Ho + d, Wo + d
    xp = jnp.pad(
        x,
        ((0, 0), (pad, pad + s * Ha - Hp), (pad, pad + s * Wa - Wp), (0, 0)),
        constant_values=fill)
    ph = xp.reshape(N, Ha, s, Wa, s, C).transpose(2, 4, 0, 1, 3, 5)
    Mw = N * Ha * Wa
    ph = ph.reshape(s * s, Mw, C)
    dmax = d * Wa + d
    tm_eff = min(tm, _round_up(Mw, 8))
    n_tiles = -(-Mw // tm_eff)
    rows_pad = n_tiles * tm_eff + dmax
    ph = jnp.pad(ph, ((0, 0), (0, rows_pad - Mw), (0, 0)),
                 constant_values=fill)
    # TODO(synk): the Ha*Wa "wide" rows include junk rows that are computed and
    # sliced away; a valid-row tiling (or an im2col fallback for the
    # small-spatial layer3/layer4 convs) would trim that MXU over-compute.
    pht = jnp.stack(
        [ph[:, i * tm_eff:i * tm_eff + tm_eff + dmax, :]
         for i in range(n_tiles)], axis=0)
    taps = tuple(
        (ki * k + kj, (ki % s) * s + (kj % s), (ki // s) * Wa + (kj // s))
        for ki in range(k) for kj in range(k))
    return pht, taps, tm_eff, n_tiles, Mw, (N, Ha, Wa, Ho, Wo)


def conv3x3_bn_relu(x, w9, scale, bias, *, stride, tm=512):
    """x NHWC bf16, w9 (9, Cin, Cout) bf16 (tap-major), fused BN + ReLU."""
    Cin = x.shape[3]
    Cout = w9.shape[2]
    tn = _pick_tn(Cout)
    pht, taps, tm_eff, n_tiles, Mw, (N, Ha, Wa, Ho, Wo) = _phase_pack_tiled(
        x, 3, stride, 1, 0.0, tm)
    phases, rows_blk = pht.shape[1], pht.shape[2]
    out = pl.pallas_call(
        functools.partial(_conv3x3_kernel, taps=taps),
        out_shape=jax.ShapeDtypeStruct((n_tiles * tm_eff, Cout), jnp.bfloat16),
        grid=(n_tiles, Cout // tn),
        in_specs=[
            pl.BlockSpec((1, phases, rows_blk, Cin), lambda i, j: (i, 0, 0, 0)),
            pl.BlockSpec((9, Cin, tn), lambda i, j: (0, 0, j)),
            pl.BlockSpec((1, tn), lambda i, j: (0, j)),
            pl.BlockSpec((1, tn), lambda i, j: (0, j)),
        ],
        out_specs=pl.BlockSpec((tm_eff, tn), lambda i, j: (i, j)),
        compiler_params=pltpu.CompilerParams(
            dimension_semantics=("parallel", "parallel"),
            vmem_limit_bytes=_VMEM_LIMIT),
    )(pht, w9, scale, bias)
    return out[:Mw].reshape(N, Ha, Wa, Cout)[:, :Ho, :Wo, :]


def maxpool_3x3_s2(x, *, tm=1024):
    """PyTorch MaxPool2d(kernel_size=3, stride=2, padding=1) on NHWC bf16."""
    N, H, W, C = x.shape
    pht, taps, tm_eff, n_tiles, Mw, (_, Ha, Wa, Ho, Wo) = _phase_pack_tiled(
        x, 3, 2, 1, float("-inf"), tm)
    phases, rows_blk = pht.shape[1], pht.shape[2]
    out = pl.pallas_call(
        functools.partial(_maxpool_kernel, taps=taps),
        out_shape=jax.ShapeDtypeStruct((n_tiles * tm_eff, C), x.dtype),
        grid=(n_tiles,),
        in_specs=[
            pl.BlockSpec((1, phases, rows_blk, C), lambda i: (i, 0, 0, 0)),
        ],
        out_specs=pl.BlockSpec((tm_eff, C), lambda i: (i, 0)),
        compiler_params=pltpu.CompilerParams(
            dimension_semantics=("parallel",),
            vmem_limit_bytes=_VMEM_LIMIT),
    )(pht)
    return out[:Mw].reshape(N, Ha, Wa, C)[:, :Ho, :Wo, :]


def conv1x1_bn(x, w, scale, bias, *, stride=1, relu=True, residual=None):
    """1x1 conv + BN (+ optional fused residual add + ReLU). x NHWC bf16."""
    if stride != 1:
        # TODO(synk): fold this strided subsample into the matmul's index_map /
        # DMA instead of a separate XLA strided-slice pass over the activation.
        x = x[:, ::stride, ::stride, :]
    N, H, W, C = x.shape
    Cout = w.shape[1]
    res2 = residual.reshape(N * H * W, Cout) if residual is not None else None
    y = matmul_bn(x.reshape(N * H * W, C), w, scale, bias,
                  relu=relu, residual=res2)
    return y.reshape(N, H, W, Cout)


def conv7x7_bn_relu(x, w_km, scale, bias):
    """Stem conv: 7x7, stride 2, pad 3. Cin padded to 8, Cout padded to 128.
    Keeps a small bf16 im2col (K = 7*7*8 = 392): one dense lane-aligned MXU
    matmul beats 49 K=8 tap matmuls at this size."""
    # TODO(synk): build the patches via phase-packing instead of 49 strided
    # slices to cut the stem's (one-off) HBM traffic ~2-3x.
    N, H, W, C = x.shape
    k, s, pad = 7, 2, 3
    Hp, Wp = H + 2 * pad, W + 2 * pad
    Ho, Wo = (Hp - k) // s + 1, (Wp - k) // s + 1
    xp = jnp.pad(x, ((0, 0), (pad, pad), (pad, pad), (0, 0)))
    cols = [xp[:, i:i + s * Ho:s, j:j + s * Wo:s, :]
            for i in range(k) for j in range(k)]
    patches = jnp.stack(cols, axis=3).reshape(N * Ho * Wo, k * k * C)
    y = matmul_bn(patches, w_km, scale, bias, relu=True)
    return y.reshape(N, Ho, Wo, w_km.shape[1])


# --------------------------------------------------------------------------
# Parameters (deterministic init, torchvision resnet50 shapes, pre-laid-out:
# bf16 weights, folded BN as (1, C) f32, 64-channel dims zero-padded to 128
# so every kernel output is lane-dense)
# --------------------------------------------------------------------------
def _fold_bn(gamma, beta, mean, var, eps=1e-5):
    scale = gamma / jnp.sqrt(var + eps)
    bias = beta - mean * scale
    return (scale.reshape(1, -1).astype(jnp.float32),
            bias.reshape(1, -1).astype(jnp.float32))


def init_resnet50_params(key):
    keys = iter(jax.random.split(key, 512))
    LANE = 128

    def dense_w(cin, cout, cin_pad=None, cout_pad=None):
        cin_pad = cin_pad or cin
        cout_pad = cout_pad or cout
        w = jax.random.normal(next(keys), (cin, cout), jnp.float32)
        w = w / jnp.sqrt(jnp.float32(cin))
        w = jnp.pad(w, ((0, cin_pad - cin), (0, cout_pad - cout)))
        return w.astype(jnp.bfloat16)

    def conv3x3_w(cin, cout, cin_pad=None, cout_pad=None):
        cin_pad = cin_pad or cin
        cout_pad = cout_pad or cout
        w = jax.random.normal(next(keys), (9, cin, cout), jnp.float32)
        w = w / jnp.sqrt(jnp.float32(9 * cin))
        w = jnp.pad(w, ((0, 0), (0, cin_pad - cin), (0, cout_pad - cout)))
        return w.astype(jnp.bfloat16)

    def bn(c, c_pad=None):
        c_pad = c_pad or c
        gamma = jax.random.uniform(next(keys), (c,), jnp.float32, 0.5, 1.5)
        beta = 0.1 * jax.random.normal(next(keys), (c,), jnp.float32)
        mean = 0.1 * jax.random.normal(next(keys), (c,), jnp.float32)
        var = jax.random.uniform(next(keys), (c,), jnp.float32, 0.5, 1.5)
        s, b = _fold_bn(gamma, beta, mean, var)
        if c_pad != c:  # padded channels: scale=bias=0 -> output exactly 0
            s = jnp.pad(s, ((0, 0), (0, c_pad - c)))
            b = jnp.pad(b, ((0, 0), (0, c_pad - c)))
        return s, b

    def bottleneck(cin, planes, stride, cin_carried=None):
        cin_c = cin_carried or cin
        pp = max(planes, LANE)      # lane-dense "planes" (64 -> 128 in layer1)
        out_c = planes * 4
        p = {"w1": dense_w(cin, planes, cin_pad=cin_c, cout_pad=pp),
             "bn1": bn(planes, pp),
             "w2": conv3x3_w(planes, planes, cin_pad=pp, cout_pad=pp),
             "bn2": bn(planes, pp),
             "w3": dense_w(planes, out_c, cin_pad=pp),
             "bn3": bn(out_c)}
        if stride != 1 or cin != out_c:
            p["down_w"] = dense_w(cin, out_c, cin_pad=cin_c)
            p["dbn"] = bn(out_c)
        return p

    def layer(cin, planes, nblocks, stride, cin_carried=None):
        blocks = [bottleneck(cin, planes, stride, cin_carried)]
        blocks += [bottleneck(planes * 4, planes, 1)
                   for _ in range(nblocks - 1)]
        return blocks

    # Stem 7x7 conv: Cin padded 3 -> 8, Cout padded 64 -> 128 (lane-dense).
    w1 = jax.random.normal(next(keys), (7, 7, 3, 64), jnp.float32)
    w1 = w1 / jnp.sqrt(jnp.float32(7 * 7 * 3))
    w1 = jnp.pad(w1, ((0, 0), (0, 0), (0, 5), (0, 64)))
    conv1_w = w1.reshape(7 * 7 * 8, 128).astype(jnp.bfloat16)

    return {
        "conv1_w": conv1_w, "bn1": bn(64, 128),
        "layer1": layer(64, 64, 3, 1, cin_carried=128),
        "layer2": layer(256, 128, 4, 2),
        "layer3": layer(512, 256, 6, 2),
        "layer4": layer(1024, 512, 3, 2),
    }


# --------------------------------------------------------------------------
# Forward pass (mirrors the PyTorch ResNet50 backbone forward)
# --------------------------------------------------------------------------
def _bottleneck_fwd(x, p, stride):
    if "down_w" in p:
        ds, db = p["dbn"]
        identity = conv1x1_bn(x, p["down_w"], ds, db,
                              stride=stride, relu=False)
    else:
        identity = x
    s1, b1 = p["bn1"]
    s2, b2 = p["bn2"]
    s3, b3 = p["bn3"]
    out = conv1x1_bn(x, p["w1"], s1, b1, relu=True)
    out = conv3x3_bn_relu(out, p["w2"], s2, b2, stride=stride)
    # Final 1x1 conv with fused residual add + ReLU.
    out = conv1x1_bn(out, p["w3"], s3, b3, relu=True, residual=identity)
    return out


def _layer_fwd(x, blocks, first_stride):
    for i, blk in enumerate(blocks):
        x = _bottleneck_fwd(x, blk, stride=first_stride if i == 0 else 1)
    return x


@jax.jit
def resnet50_forward(params, x_nchw):
    x = jnp.transpose(x_nchw, (0, 2, 3, 1)).astype(jnp.bfloat16)  # NCHW->NHWC
    x = jnp.pad(x, ((0, 0), (0, 0), (0, 0), (0, 8 - x.shape[-1])))  # Cin 3->8
    s1, b1 = params["bn1"]
    x = conv7x7_bn_relu(x, params["conv1_w"], s1, b1)   # 128 ch (64 real)
    x = maxpool_3x3_s2(x)
    l1 = _layer_fwd(x, params["layer1"], first_stride=1)
    l2 = _layer_fwd(l1, params["layer2"], first_stride=2)
    l3 = _layer_fwd(l2, params["layer3"], first_stride=2)
    l4 = _layer_fwd(l3, params["layer4"], first_stride=2)
    # return NCHW f32, like the PyTorch module
    return tuple(jnp.transpose(t.astype(jnp.float32), (0, 3, 1, 2))
                 for t in (l1, l2, l3, l4))


# --------------------------------------------------------------------------
# Pure-jnp references for kernel validation (review correctness concern)
# --------------------------------------------------------------------------
def _conv3x3_reference(x, w9, scale, bias, stride):
    xf = x.astype(jnp.float32)
    wf = w9.astype(jnp.float32)
    N, H, W, _ = x.shape
    Cout = w9.shape[2]
    xp = jnp.pad(xf, ((0, 0), (1, 1), (1, 1), (0, 0)))
    Ho = (H + 2 - 3) // stride + 1
    Wo = (W + 2 - 3) // stride + 1
    out = jnp.zeros((N, Ho, Wo, Cout), jnp.float32)
    for ki in range(3):
        for kj in range(3):
            patch = xp[:, ki:ki + stride * Ho:stride,
                       kj:kj + stride * Wo:stride, :]
            out = out + jnp.einsum("nhwc,cd->nhwd", patch, wf[ki * 3 + kj])
    out = out * scale.reshape(1, 1, 1, -1) + bias.reshape(1, 1, 1, -1)
    return jnp.maximum(out, 0.0)


def _maxpool_reference(x):
    return jax.lax.reduce_window(
        x.astype(jnp.float32), -jnp.inf, jax.lax.max,
        (1, 3, 3, 1), (1, 2, 2, 1), ((0, 0), (1, 1), (1, 1), (0, 0)))


# --------------------------------------------------------------------------
if __name__ == "__main__":
    key = jax.random.PRNGKey(0)
    k_params, k_input, k_test = jax.random.split(key, 3)

    # --- numerical validation of the fused conv / pool kernels (multi-tile) ---
    kv = jax.random.split(k_test, 4)
    xt = jax.random.normal(kv[0], (2, 9, 9, 128), jnp.float32).astype(jnp.bfloat16)
    wt = (jax.random.normal(kv[1], (9, 128, 128), jnp.float32)
          / jnp.sqrt(jnp.float32(9 * 128))).astype(jnp.bfloat16)
    st = jax.random.uniform(kv[2], (1, 128), jnp.float32, 0.5, 1.5)
    bt = 0.1 * jax.random.normal(kv[3], (1, 128), jnp.float32)
    for stride in (1, 2):
        got = conv3x3_bn_relu(xt, wt, st, bt, stride=stride, tm=64)
        ref = _conv3x3_reference(xt, wt, st, bt, stride)
        err = float(jnp.max(jnp.abs(got.astype(jnp.float32) - ref)))
        assert err < 0.1, ("conv3x3 mismatch", stride, err)
    got = maxpool_3x3_s2(xt, tm=64)
    ref = _maxpool_reference(xt)
    err = float(jnp.max(jnp.abs(got.astype(jnp.float32) - ref)))
    assert err < 1e-6, ("maxpool mismatch", err)

    # --- full backbone forward ---
    params = init_resnet50_params(k_params)
    x = jax.random.normal(k_input, (2, 3, 32, 32), jnp.float32)  # NCHW input

    l1, l2, l3, l4 = resnet50_forward(params, x)
    jax.block_until_ready((l1, l2, l3, l4))

    assert l1.shape == (2, 256, 8, 8), l1.shape
    assert l2.shape == (2, 512, 4, 4), l2.shape
    assert l3.shape == (2, 1024, 2, 2), l3.shape
    assert l4.shape == (2, 2048, 1, 1), l4.shape
    assert all(bool(jnp.isfinite(t).all()) for t in (l1, l2, l3, l4))
    print("KERNEL_OK")
</pallas_src>

<mosaic_0001>
module attributes {stable_mosaic.version = 11 : i64} {
  func.func @_conv3x3_kernel(%arg0: i32, %arg1: i32, %arg2: memref<1x1x88x128xbf16, #tpu.memory_space<vmem>>, %arg3: memref<9x128x128xbf16, #tpu.memory_space<vmem>>, %arg4: memref<1x128xf32, #tpu.memory_space<vmem>>, %arg5: memref<1x128xf32, #tpu.memory_space<vmem>>, %arg6: memref<64x128xbf16, #tpu.memory_space<vmem>>) attributes {dimension_semantics = [#tpu.dimension_semantics<parallel>, #tpu.dimension_semantics<parallel>], iteration_bounds = array<i64: 4, 1>, scalar_prefetch = 0 : i64, scratch_operands = 0 : i64, tpu.core_type = #tpu.core_type<tc>, window_params = [{transform_indices = @transform_0, window_bounds = array<i64: 1, 1, 88, 128>}, {transform_indices = @transform_1, window_bounds = array<i64: 9, 128, 128>}, {transform_indices = @transform_2, window_bounds = array<i64: 1, 128>}, {transform_indices = @transform_3, window_bounds = array<i64: 1, 128>}, {transform_indices = @transform_4, window_bounds = array<i64: 64, 128>}]} {
    %c0 = arith.constant 0 : index
    %c0_0 = arith.constant 0 : index
    %c0_1 = arith.constant 0 : index
    %c0_2 = arith.constant 0 : index
    %0 = vector.load %arg2[%c0, %c0_0, %c0_1, %c0_2] : memref<1x1x88x128xbf16, #tpu.memory_space<vmem>>, vector<1x1x64x128xbf16>
    %1 = vector.shape_cast %0 : vector<1x1x64x128xbf16> to vector<64x128xbf16>
    %c0_3 = arith.constant 0 : index
    %c0_4 = arith.constant 0 : index
    %c0_5 = arith.constant 0 : index
    %2 = vector.load %arg3[%c0_3, %c0_4, %c0_5] : memref<9x128x128xbf16, #tpu.memory_space<vmem>>, vector<1x128x128xbf16>
    %3 = vector.shape_cast %2 : vector<1x128x128xbf16> to vector<128x128xbf16>
    %cst = arith.constant dense<0.000000e+00> : vector<64x128xf32>
    %4 = tpu.matmul %1, %3, %cst {dimension_numbers = #tpu.dot_dimension_numbers<[1], [0], [0], [1], [0, 0, 1, 1], [], []>} : vector<64x128xbf16>, vector<128x128xbf16>, vector<64x128xf32> -> vector<64x128xf32>
    %c0_6 = arith.constant 0 : index
    %c0_7 = arith.constant 0 : index
    %c1 = arith.constant 1 : index
    %c0_8 = arith.constant 0 : index
    %5 = vector.load %arg2[%c0_6, %c0_7, %c1, %c0_8] : memref<1x1x88x128xbf16, #tpu.memory_space<vmem>>, vector<1x1x64x128xbf16>
    %6 = vector.shape_cast %5 : vector<1x1x64x128xbf16> to vector<64x128xbf16>
    %c1_9 = arith.constant 1 : index
    %c0_10 = arith.constant 0 : index
    %c0_11 = arith.constant 0 : index
    %7 = vector.load %arg3[%c1_9, %c0_10, %c0_11] : memref<9x128x128xbf16, #tpu.memory_space<vmem>>, vector<1x128x128xbf16>
    %8 = vector.shape_cast %7 : vector<1x128x128xbf16> to vector<128x128xbf16>
    %cst_12 = arith.constant dense<0.000000e+00> : vector<64x128xf32>
    %9 = tpu.matmul %6, %8, %cst_12 {dimension_numbers = #tpu.dot_dimension_numbers<[1], [0], [0], [1], [0, 0, 1, 1], [], []>} : vector<64x128xbf16>, vector<128x128xbf16>, vector<64x128xf32> -> vector<64x128xf32>
    %10 = arith.addf %4, %9 : vector<64x128xf32>
    %c0_13 = arith.constant 0 : index
    %c0_14 = arith.constant 0 : index
    %c2 = arith.constant 2 : index
    %c0_15 = arith.constant 0 : index
    %11 = vector.load %arg2[%c0_13, %c0_14, %c2, %c0_15] : memref<1x1x88x128xbf16, #tpu.memory_space<vmem>>, vector<1x1x64x128xbf16>
    %12 = vector.shape_cast %11 : vector<1x1x64x128xbf16> to vector<64x128xbf16>
    %c2_16 = arith.constant 2 : index
    %c0_17 = arith.constant 0 : index
    %c0_18 = arith.constant 0 : index
    %13 = vector.load %arg3[%c2_16, %c0_17, %c0_18] : memref<9x128x128xbf16, #tpu.memory_space<vmem>>, vector<1x128x128xbf16>
    %14 = vector.shape_cast %13 : vector<1x128x128xbf16> to vector<128x128xbf16>
    %cst_19 = arith.constant dense<0.000000e+00> : vector<64x128xf32>
    %15 = tpu.matmul %12, %14, %cst_19 {dimension_numbers = #tpu.dot_dimension_numbers<[1], [0], [0], [1], [0, 0, 1, 1], [], []>} : vector<64x128xbf16>, vector<128x128xbf16>, vector<64x128xf32> -> vector<64x128xf32>
    %16 = arith.addf %10, %15 : vector<64x128xf32>
    %c0_20 = arith.constant 0 : index
    %c0_21 = arith.constant 0 : index
    %c11 = arith.constant 11 : index
    %c0_22 = arith.constant 0 : index
    %17 = vector.load %arg2[%c0_20, %c0_21, %c11, %c0_22] : memref<1x1x88x128xbf16, #tpu.memory_space<vmem>>, vector<1x1x64x128xbf16>
    %18 = vector.shape_cast %17 : vector<1x1x64x128xbf16> to vector<64x128xbf16>
    %c3 = arith.constant 3 : index
    %c0_23 = arith.constant 0 : index
    %c0_24 = arith.constant 0 : index
    %19 = vector.load %arg3[%c3, %c0_23, %c0_24] : memref<9x128x128xbf16, #tpu.memory_space<vmem>>, vector<1x128x128xbf16>
    %20 = vector.shape_cast %19 : vector<1x128x128xbf16> to vector<128x128xbf16>
    %cst_25 = arith.constant dense<0.000000e+00> : vector<64x128xf32>
    %21 = tpu.matmul %18, %20, %cst_25 {dimension_numbers = #tpu.dot_dimension_numbers<[1], [0], [0], [1], [0, 0, 1, 1], [], []>} : vector<64x128xbf16>, vector<128x128xbf16>, vector<64x128xf32> -> vector<64x128xf32>
    %22 = arith.addf %16, %21 : vector<64x128xf32>
    %c0_26 = arith.constant 0 : index
    %c0_27 = arith.constant 0 : index
    %c12 = arith.constant 12 : index
    %c0_28 = arith.constant 0 : index
    %23 = vector.load %arg2[%c0_26, %c0_27, %c12, %c0_28] : memref<1x1x88x128xbf16, #tpu.memory_space<vmem>>, vector<1x1x64x128xbf16>
    %24 = vector.shape_cast %23 : vector<1x1x64x128xbf16> to vector<64x128xbf16>
    %c4 = arith.constant 4 : index
    %c0_29 = arith.constant 0 : index
    %c0_30 = arith.constant 0 : index
    %25 = vector.load %arg3[%c4, %c0_29, %c0_30] : memref<9x128x128xbf16, #tpu.memory_space<vmem>>, vector<1x128x128xbf16>
    %26 = vector.shape_cast %25 : vector<1x128x128xbf16> to vector<128x128xbf16>
    %cst_31 = arith.constant dense<0.000000e+00> : vector<64x128xf32>
    %27 = tpu.matmul %24, %26, %cst_31 {dimension_numbers = #tpu.dot_dimension_numbers<[1], [0], [0], [1], [0, 0, 1, 1], [], []>} : vector<64x128xbf16>, vector<128x128xbf16>, vector<64x128xf32> -> vector<64x128xf32>
    %28 = arith.addf %22, %27 : vector<64x128xf32>
    %c0_32 = arith.constant 0 : index
    %c0_33 = arith.constant 0 : index
    %c13 = arith.constant 13 : index
    %c0_34 = arith.constant 0 : index
    %29 = vector.load %arg2[%c0_32, %c0_33, %c13, %c0_34] : memref<1x1x88x128xbf16, #tpu.memory_space<vmem>>, vector<1x1x64x128xbf16>
    %30 = vector.shape_cast %29 : vector<1x1x64x128xbf16> to vector<64x128xbf16>
    %c5 = arith.constant 5 : index
    %c0_35 = arith.constant 0 : index
    %c0_36 = arith.constant 0 : index
    %31 = vector.load %arg3[%c5, %c0_35, %c0_36] : memref<9x128x128xbf16, #tpu.memory_space<vmem>>, vector<1x128x128xbf16>
    %32 = vector.shape_cast %31 : vector<1x128x128xbf16> to vector<128x128xbf16>
    %cst_37 = arith.constant dense<0.000000e+00> : vector<64x128xf32>
    %33 = tpu.matmul %30, %32, %cst_37 {dimension_numbers = #tpu.dot_dimension_numbers<[1], [0], [0], [1], [0, 0, 1, 1], [], []>} : vector<64x128xbf16>, vector<128x128xbf16>, vector<64x128xf32> -> vector<64x128xf32>
    %34 = arith.addf %28, %33 : vector<64x128xf32>
    %c0_38 = arith.constant 0 : index
    %c0_39 = arith.constant 0 : index
    %c22 = arith.constant 22 : index
    %c0_40 = arith.constant 0 : index
    %35 = vector.load %arg2[%c0_38, %c0_39, %c22, %c0_40] : memref<1x1x88x128xbf16, #tpu.memory_space<vmem>>, vector<1x1x64x128xbf16>
    %36 = vector.shape_cast %35 : vector<1x1x64x128xbf16> to vector<64x128xbf16>
    %c6 = arith.constant 6 : index
    %c0_41 = arith.constant 0 : index
    %c0_42 = arith.constant 0 : index
    %37 = vector.load %arg3[%c6, %c0_41, %c0_42] : memref<9x128x128xbf16, #tpu.memory_space<vmem>>, vector<1x128x128xbf16>
    %38 = vector.shape_cast %37 : vector<1x128x128xbf16> to vector<128x128xbf16>
    %cst_43 = arith.constant dense<0.000000e+00> : vector<64x128xf32>
    %39 = tpu.matmul %36, %38, %cst_43 {dimension_numbers = #tpu.dot_dimension_numbers<[1], [0], [0], [1], [0, 0, 1, 1], [], []>} : vector<64x128xbf16>, vector<128x128xbf16>, vector<64x128xf32> -> vector<64x128xf32>
    %40 = arith.addf %34, %39 : vector<64x128xf32>
    %c0_44 = arith.constant 0 : index
    %c0_45 = arith.constant 0 : index
    %c23 = arith.constant 23 : index
    %c0_46 = arith.constant 0 : index
    %41 = vector.load %arg2[%c0_44, %c0_45, %c23, %c0_46] : memref<1x1x88x128xbf16, #tpu.memory_space<vmem>>, vector<1x1x64x128xbf16>
    %42 = vector.shape_cast %41 : vector<1x1x64x128xbf16> to vector<64x128xbf16>
    %c7 = arith.constant 7 : index
    %c0_47 = arith.constant 0 : index
    %c0_48 = arith.constant 0 : index
    %43 = vector.load %arg3[%c7, %c0_47, %c0_48] : memref<9x128x128xbf16, #tpu.memory_space<vmem>>, vector<1x128x128xbf16>
    %44 = vector.shape_cast %43 : vector<1x128x128xbf16> to vector<128x128xbf16>
    %cst_49 = arith.constant dense<0.000000e+00> : vector<64x128xf32>
    %45 = tpu.matmul %42, %44, %cst_49 {dimension_numbers = #tpu.dot_dimension_numbers<[1], [0], [0], [1], [0, 0, 1, 1], [], []>} : vector<64x128xbf16>, vector<128x128xbf16>, vector<64x128xf32> -> vector<64x128xf32>
    %46 = arith.addf %40, %45 : vector<64x128xf32>
    %c0_50 = arith.constant 0 : index
    %c0_51 = arith.constant 0 : index
    %c24 = arith.constant 24 : index
    %c0_52 = arith.constant 0 : index
    %47 = vector.load %arg2[%c0_50, %c0_51, %c24, %c0_52] : memref<1x1x88x128xbf16, #tpu.memory_space<vmem>>, vector<1x1x64x128xbf16>
    %48 = vector.shape_cast %47 : vector<1x1x64x128xbf16> to vector<64x128xbf16>
    %c8 = arith.constant 8 : index
    %c0_53 = arith.constant 0 : index
    %c0_54 = arith.constant 0 : index
    %49 = vector.load %arg3[%c8, %c0_53, %c0_54] : memref<9x128x128xbf16, #tpu.memory_space<vmem>>, vector<1x128x128xbf16>
    %50 = vector.shape_cast %49 : vector<1x128x128xbf16> to vector<128x128xbf16>
    %cst_55 = arith.constant dense<0.000000e+00> : vector<64x128xf32>
    %51 = tpu.matmul %48, %50, %cst_55 {dimension_numbers = #tpu.dot_dimension_numbers<[1], [0], [0], [1], [0, 0, 1, 1], [], []>} : vector<64x128xbf16>, vector<128x128xbf16>, vector<64x128xf32> -> vector<64x128xf32>
    %52 = arith.addf %46, %51 : vector<64x128xf32>
    %c0_56 = arith.constant 0 : index
    %c0_57 = arith.constant 0 : index
    %53 = vector.load %arg4[%c0_56, %c0_57] : memref<1x128xf32, #tpu.memory_space<vmem>>, vector<1x128xf32>
    %54 = vector.broadcast %53 : vector<1x128xf32> to vector<64x128xf32>
    %55 = arith.mulf %52, %54 : vector<64x128xf32>
    %c0_58 = arith.constant 0 : index
    %c0_59 = arith.constant 0 : index
    %56 = vector.load %arg5[%c0_58, %c0_59] : memref<1x128xf32, #tpu.memory_space<vmem>>, vector<1x128xf32>
    %57 = vector.broadcast %56 : vector<1x128xf32> to vector<64x128xf32>
    %58 = arith.addf %55, %57 : vector<64x128xf32>
    %cst_60 = arith.constant 0.000000e+00 : f32
    %59 = vector.broadcast %cst_60 : f32 to vector<64x128xf32>
    %60 = arith.maximumf %58, %59 : vector<64x128xf32>
    %61 = arith.truncf %60 : vector<64x128xf32> to vector<64x128xbf16>
    %c0_61 = arith.constant 0 : index
    %c0_62 = arith.constant 0 : index
    %62 = vector.load %arg6[%c0_61, %c0_62] : memref<64x128xbf16, #tpu.memory_space<vmem>>, vector<64x128xbf16>
    tpu.vector_store %arg6[%c0_61, %c0_62], %61 {strides = array<i32>} : memref<64x128xbf16, #tpu.memory_space<vmem>>, vector<64x128xbf16>,
    return
  }
  func.func @transform_0(%arg0: i32, %arg1: i32) -> (i32, i32, i32, i32) {
    %c0_i32 = arith.constant 0 : i32
    %c0_i32_0 = arith.constant 0 : i32
    %c0_i32_1 = arith.constant 0 : i32
    %c0_i32_2 = arith.constant 0 : i32
    return %arg0, %c0_i32, %c0_i32_0, %c0_i32_1 : i32, i32, i32, i32
  }
  func.func @transform_1(%arg0: i32, %arg1: i32) -> (i32, i32, i32) {
    %c0_i32 = arith.constant 0 : i32
    %c0_i32_0 = arith.constant 0 : i32
    %c0_i32_1 = arith.constant 0 : i32
    return %c0_i32, %c0_i32_0, %arg1 : i32, i32, i32
  }
  func.func @transform_2(%arg0: i32, %arg1: i32) -> (i32, i32) {
    %c0_i32 = arith.constant 0 : i32
    %c0_i32_0 = arith.constant 0 : i32
    return %c0_i32, %arg1 : i32, i32
  }
  func.func @transform_3(%arg0: i32, %arg1: i32) -> (i32, i32) {
    %c0_i32 = arith.constant 0 : i32
    %c0_i32_0 = arith.constant 0 : i32
    return %c0_i32, %arg1 : i32, i32
  }
  func.func @transform_4(%arg0: i32, %arg1: i32) -> (i32, i32) {
    %c0_i32 = arith.constant 0 : i32
    return %arg0, %arg1 : i32, i32
  }
}

</mosaic_0001>

<llo_original>
// kernel: tpu_custom_call.1
$region0: #{tpu_custom_call.1}
  #allocation0 [shape = 'u32[]', space=smem, size = 0x4, offset = 0x4, fixed_abs, tag = 'smem constant byte address 0x4 - core index']
  #allocation1 [shape = 'u32[144,128]{1,0:T(1,128)}', space=vmem, size = 0x12000, scoped, tag = 'internal scratch']
  %s0 = inlined_call_operand.hbm [shape: bf16[4,1,88,128], index: 0, kind: input, shape index: {}]
  %s1 = inlined_call_operand.hbm [shape: bf16[9,128,128], index: 1, kind: input, shape index: {}]
  %s2 = inlined_call_operand.vmem [shape: f32[1,128], index: 2, kind: input, shape index: {}]
  %s3 = inlined_call_operand.vmem [shape: f32[1,128], index: 3, kind: input, shape index: {}]
  %s4 = inlined_call_operand.hbm [shape: bf16[256,128], index: 4, kind: output, shape index: {}]
  %s5 = sld [smem:[#allocation0]]
  $region57: #{tpu_custom_call.1} parent=0
    _
  %s7 = ssub.s32 1, %s5
  %s8 = scalar_select 0, %s7, %s5
  $region1: #{tpu_custom_call.1} parent=0
    #allocation2 [shape = 'u8[45056]{0}', space=vmem, size = 0xb000, scoped, tag = 'input window, operand 0']
    #allocation3 [shape = 's32[2]{0}', space=sflag, size = 0x8, scoped, tag = 'scoped memory for tpu_custom_call.1']
    #allocation4 [shape = 's32[2]{0}', space=sflag, size = 0x8, scoped, tag = 'scoped memory for tpu_custom_call.1']
    #allocation5 [shape = 'u8[294912]{0}', space=vmem, size = 0x48000, scoped, tag = 'input window, operand 1, single buffered']
    #allocation6 [shape = 's32[1]{0}', space=sflag, size = 0x4, scoped, tag = 'scoped memory for tpu_custom_call.1']
    #allocation7 [shape = 'u8[32768]{0}', space=vmem, size = 0x8000, scoped, tag = 'output window, operand 0']
    %9 = vsyncpa [#allocation3], 0
    %s10 = scalar_lea.sflag [#allocation3], 1
    %11 = vsyncpa %s10, 0
    %12 = vsyncpa [#allocation6], 0
    %13 = vsyncpa [#allocation4], 0
    %s14 = scalar_lea.sflag [#allocation4], 1
    %15 = vsyncpa %s14, 0
    loop: start=0, step=1, limit=6
    $region2: #{tpu_custom_call.1} parent=1 // loop_pre_header
      _
    $region3: #{tpu_custom_call.1} parent=1 // loop_header
      %s17 = sphi 0, %s21
      %p18 = scmp.ge.s32.totalorder %s17, 6
      %s24 = sphi 0, %s36
      %s25 = sphi 0, %s32
      %s26 = sphi 0, %s24
      %s27 = sphi 0, %s25
      %s28 = sphi 0, %s26
      %s29 = sphi 0, %s27
      %s39 = sphi 0, %s41
      %s42 = sphi 0, %s39
      %s43 = sphi 0, %s42
      %s59 = sphi 0, %s43
      %s65 = sphi 0, %s67
      %s68 = sphi 0, %s65
      %s69 = sphi 0, %s68
      %s85 = sphi 0, %s69
      %s91 = sphi 0, %s93
      %s94 = sphi 0, %s91
      %s95 = sphi 0, %s94
      %s111 = sphi 0, %s95
      %s117 = sphi 0, %s119
      %s120 = sphi 0, %s117
      %s121 = sphi 0, %s120
      %s137 = sphi 0, %s121
      %s145 = sphi 0, %s147
      %s148 = sphi 0, %s145
      %s149 = sphi 0, %s148
      %s165 = sphi 0, %s149
    $region4: #{tpu_custom_call.1} parent=1 // loop_header_branch
      %20 = sbr.rel (%p18) target = $region8
    $region5: #{tpu_custom_call.1} parent=1 // loop_body
      %s22 = ssub.s32 %s17, 1
      %s23 = ssub.s32 %s17, 2
      %s30 = sadd.s32 1, %s25
      %p31 = scmp.ge.s32.totalorder %s30, 1
      %s32 = scalar_select %p31, 0, %s30
      %s33 = sadd.s32 1, %s24
      %s34 = scalar_select %p31, %s33, %s24
      %p35 = scmp.ge.s32.totalorder %s34, 4
      %s36 = scalar_select %p35, 0, %s34
      %s37 = ssub.s32 %s24, %s36
      %p38 = scmp.eq.s32.totalorder %s37, 0
      %s40 = sadd.s32 %s39, 1
      %s41 = scalar_select %p38, %s39, %s40
      %p44 = pneg %p38
      %p45 = scmp.eq.s32.totalorder %s17, 3
      %p46 = por %p44, %p45
      %p47 = scmp.ne.s32.totalorder %s39, %s42
      %p48 = scmp.eq.s32.totalorder %s17, 0
      %p49 = por %p47, %p48
      %p50 = scmp.ne.s32.totalorder %s39, %s42
      %p51 = scmp.eq.s32.totalorder %s22, 3
      %p52 = por %p50, %p51
      %p53 = scmp.ne.s32.totalorder %s42, %s43
      %p54 = scmp.eq.s32.totalorder %s22, 0
      %p55 = por %p53, %p54
      %p56 = scmp.ne.s32.totalorder %s42, %s43
      %p57 = scmp.eq.s32.totalorder %s23, 3
      %p58 = por %p56, %p57
      %p60 = scmp.ne.s32.totalorder %s43, %s59
      %p61 = scmp.eq.s32.totalorder %s23, 0
      %p62 = por %p60, %p61
      %s63 = ssub.s32 %s25, %s32
      %p64 = scmp.eq.s32.totalorder %s63, 0
      %s66 = sadd.s32 %s65, 1
      %s67 = scalar_select %p64, %s65, %s66
      %p70 = pneg %p64
      %p71 = scmp.eq.s32.totalorder %s17, 3
      %p72 = por %p70, %p71
      %p73 = scmp.ne.s32.totalorder %s65, %s68
      %p74 = scmp.eq.s32.totalorder %s17, 0
      %p75 = por %p73, %p74
      %p76 = scmp.ne.s32.totalorder %s65, %s68
      %p77 = scmp.eq.s32.totalorder %s22, 3
      %p78 = por %p76, %p77
      %p79 = scmp.ne.s32.totalorder %s68, %s69
      %p80 = scmp.eq.s32.totalorder %s22, 0
      %p81 = por %p79, %p80
      %p82 = scmp.ne.s32.totalorder %s68, %s69
      %p83 = scmp.eq.s32.totalorder %s23, 3
      %p84 = por %p82, %p83
      %p86 = scmp.ne.s32.totalorder %s69, %s85
      %p87 = scmp.eq.s32.totalorder %s23, 0
      %p88 = por %p86, %p87
      %s89 = ssub.s32 %s25, %s32
      %p90 = scmp.eq.s32.totalorder %s89, 0
      %s92 = sadd.s32 %s91, 1
      %s93 = scalar_select %p90, %s91, %s92
      %p96 = pneg %p90
      %p97 = scmp.eq.s32.totalorder %s17, 3
      %p98 = por %p96, %p97
      %p99 = scmp.ne.s32.totalorder %s91, %s94
      %p100 = scmp.eq.s32.totalorder %s17, 0
      %p101 = por %p99, %p100
      %p102 = scmp.ne.s32.totalorder %s91, %s94
      %p103 = scmp.eq.s32.totalorder %s22, 3
      %p104 = por %p102, %p103
      %p105 = scmp.ne.s32.totalorder %s94, %s95
      %p106 = scmp.eq.s32.totalorder %s22, 0
      %p107 = por %p105, %p106
      %p108 = scmp.ne.s32.totalorder %s94, %s95
      %p109 = scmp.eq.s32.totalorder %s23, 3
      %p110 = por %p108, %p109
      %p112 = scmp.ne.s32.totalorder %s95, %s111
      %p113 = scmp.eq.s32.totalorder %s23, 0
      %p114 = por %p112, %p113
      %s115 = ssub.s32 %s25, %s32
      %p116 = scmp.eq.s32.totalorder %s115, 0
      %s118 = sadd.s32 %s117, 1
      %s119 = scalar_select %p116, %s117, %s118
      %p122 = pneg %p116
      %p123 = scmp.eq.s32.totalorder %s17, 3
      %p124 = por %p122, %p123
      %p125 = scmp.ne.s32.totalorder %s117, %s120
      %p126 = scmp.eq.s32.totalorder %s17, 0
      %p127 = por %p125, %p126
      %p128 = scmp.ne.s32.totalorder %s117, %s120
      %p129 = scmp.eq.s32.totalorder %s22, 3
      %p130 = por %p128, %p129
      %p131 = scmp.ne.s32.totalorder %s120, %s121
      %p132 = scmp.eq.s32.totalorder %s22, 0
      %p133 = por %p131, %p132
      %p134 = scmp.ne.s32.totalorder %s120, %s121
      %p135 = scmp.eq.s32.totalorder %s23, 3
      %p136 = por %p134, %p135
      %p138 = scmp.ne.s32.totalorder %s121, %s137
      %p139 = scmp.eq.s32.totalorder %s23, 0
      %p140 = por %p138, %p139
      %s141 = ssub.s32 %s24, %s36
      %s142 = ssub.s32 %s25, %s32
      %s143 = sor.u32 %s141, %s142
      %p144 = scmp.eq.s32.totalorder %s143, 0
      %s146 = sadd.s32 %s145, 1
      %s147 = scalar_select %p144, %s145, %s146
      %p150 = pneg %p144
      %p151 = scmp.eq.s32.totalorder %s17, 3
      %p152 = por %p150, %p151
      %p153 = scmp.ne.s32.totalorder %s145, %s148
      %p154 = scmp.eq.s32.totalorder %s17, 0
      %p155 = por %p153, %p154
      %p156 = scmp.ne.s32.totalorder %s145, %s148
      %p157 = scmp.eq.s32.totalorder %s22, 3
      %p158 = por %p156, %p157
      %p159 = scmp.ne.s32.totalorder %s148, %s149
      %p160 = scmp.eq.s32.totalorder %s22, 0
      %p161 = por %p159, %p160
      %p162 = scmp.ne.s32.totalorder %s148, %s149
      %p163 = scmp.eq.s32.totalorder %s23, 3
      %p164 = por %p162, %p163
      %p166 = scmp.ne.s32.totalorder %s149, %s165
      %p167 = scmp.eq.s32.totalorder %s23, 0
      %p168 = por %p166, %p167
      %p169 = scmp.le.s32.totalorder 1, %s17
      %p170 = scmp.lt.s32.totalorder %s17, 5
      %p171 = pnand %p169, %p170
      %p172 = pneg %p171
      // Predicated region
      $region9: #{tpu_custom_call.1} parent=5 // pred_check
        _
      $region10: #{tpu_custom_call.1} parent=5 // pred_check_branch
        %174 = sbr.rel (%p171) target = $region12
      $region11: #{tpu_custom_call.1} parent=5 // pred_region
        %s175 = ssub.s32 %s17, 1
        // Predicated region
        $region13: #{tpu_custom_call.1} parent=11 // pred_check
          %p176 = pneg %p81
        $region14: #{tpu_custom_call.1} parent=11 // pred_check_branch
          %178 = sbr.rel (%p176) target = $region16
        $region15: #{tpu_custom_call.1} parent=11 // pred_region
          %s180 = ssub.s32 9216, 9216
          %181 = vsyncadd [#allocation6], %s180
          %s182 = smul.addr %s27, 64
          %s183 = scalar_lea.hbm %s1, %s182
          %s184 = sshll.u32 [#allocation5], 4
          %s185 = int_to_ptr.vmem [resolvable:$true] %s184
          %190 = dma.hbm_to_vmem [thread:$0]  %s183, 9216, %s185, [#allocation6], 64, 64, 4
        $region16: #{tpu_custom_call.1} parent=11 // pred_fallthru
          _
        // Predicated region
        $region17: #{tpu_custom_call.1} parent=11 // pred_check
          %p191 = pneg %p107
        $region18: #{tpu_custom_call.1} parent=11 // pred_check_branch
          %193 = sbr.rel (%p191) target = $region20
        $region19: #{tpu_custom_call.1} parent=11 // pred_region
          %p194 = scmp.lt.s32.totalorder %s27, 0
          %s195 = scalar_select %p194, %s27, 0
          %s196 = scalar_lea.vmem %s2, %s195
        $region20: #{tpu_custom_call.1} parent=11 // pred_fallthru
          _
        // Predicated region
        $region21: #{tpu_custom_call.1} parent=11 // pred_check
          %p197 = pneg %p133
        $region22: #{tpu_custom_call.1} parent=11 // pred_check_branch
          %199 = sbr.rel (%p197) target = $region24
        $region23: #{tpu_custom_call.1} parent=11 // pred_region
          %p200 = scmp.lt.s32.totalorder %s27, 0
          %s201 = scalar_select %p200, %s27, 0
          %s202 = scalar_lea.vmem %s3, %s201
        $region24: #{tpu_custom_call.1} parent=11 // pred_fallthru
          _
      $region12: #{tpu_custom_call.1} parent=5 // pred_fallthru
        _
      %p203 = scmp.lt.s32.totalorder %s17, 4
      // Predicated region
      $region25: #{tpu_custom_call.1} parent=5 // pred_check
        %p204 = pneg %p203
      $region26: #{tpu_custom_call.1} parent=5 // pred_check_branch
        %206 = sbr.rel (%p204) target = $region28
      $region27: #{tpu_custom_call.1} parent=5 // pred_region
        // Predicated region
        $region29: #{tpu_custom_call.1} parent=27 // pred_check
          %p207 = pneg %p49
        $region30: #{tpu_custom_call.1} parent=27 // pred_check_branch
          %209 = sbr.rel (%p207) target = $region32
        $region31: #{tpu_custom_call.1} parent=27 // pred_region
          %s210 = sand.u32 %s39, 1
          %s211 = scalar_lea.sflag [#allocation3], %s210
          %s212 = sand.u32 %s39, 1
          %s213 = smul.addr %s212, 44
          %s214 = scalar_lea.vmem [#allocation2], %s213
          %s216 = ssub.s32 704, 704
          %217 = vsyncadd %s211, %s216
          %s218 = smul.addr %s24, 11
          %s219 = smul.addr %s218, 64
          %s220 = scalar_lea.hbm %s0, %s219
          %s221 = sshll.u32 %s214, 4
          %s222 = int_to_ptr.vmem [resolvable:$true] %s221
          %227 = dma.hbm_to_vmem [thread:$0]  %s220, 704, %s222, %s211, 64, 64, 4
        $region32: #{tpu_custom_call.1} parent=27 // pred_fallthru
          _
      $region28: #{tpu_custom_call.1} parent=5 // pred_fallthru
        _
      %p228 = scmp.le.s32.totalorder 1, %s17
      %p229 = scmp.lt.s32.totalorder %s17, 5
      %p230 = pnand %p228, %p229
      %p231 = pneg %p230
      // Predicated region
      $region33: #{tpu_custom_call.1} parent=5 // pred_check
        _
      $region34: #{tpu_custom_call.1} parent=5 // pred_check_branch
        %233 = sbr.rel (%p230) target = $region36
      $region35: #{tpu_custom_call.1} parent=5 // pred_region
        %s234 = ssub.s32 %s17, 1
        %s235 = sand.u32 %s42, 1
        %s236 = scalar_lea.sflag [#allocation3], %s235
        %s237 = sand.u32 %s42, 1
        %s238 = smul.addr %s237, 44
        %s239 = scalar_lea.vmem [#allocation2], %s238
        // Predicated region
        $region37: #{tpu_custom_call.1} parent=35 // pred_check
          %p240 = pneg %p55
        $region38: #{tpu_custom_call.1} parent=35 // pred_check_branch
          %242 = sbr.rel (%p240) target = $region40
        $region39: #{tpu_custom_call.1} parent=35 // pred_region
          %243 = dma.done %s236, 704
        $region40: #{tpu_custom_call.1} parent=35 // pred_fallthru
          _
        // Predicated region
        $region41: #{tpu_custom_call.1} parent=35 // pred_check
          %p244 = pneg %p81
        $region42: #{tpu_custom_call.1} parent=35 // pred_check_branch
          %246 = sbr.rel (%p244) target = $region44
        $region43: #{tpu_custom_call.1} parent=35 // pred_region
          %247 = dma.done [#allocation6], 9216
        $region44: #{tpu_custom_call.1} parent=35 // pred_fallthru
          _
        %s248 = sand.u32 %s42, 1
        %s249 = scalar_lea.sflag [#allocation3], %s248
        %s250 = sand.u32 %s42, 1
        %s251 = smul.addr %s250, 44
        %s252 = scalar_lea.vmem [#allocation2], %s251
        %p253 = pneg %p55
        %p254 = pneg %p52
        %p255 = pneg %p81
        %p256 = pneg %p78
        %p257 = scmp.lt.s32.totalorder %s27, 0
        %s258 = scalar_select %p257, %s27, 0
        %s259 = scalar_lea.vmem %s2, %s258
        %p260 = pneg %p107
        %p261 = pneg %p104
        %p262 = scmp.lt.s32.totalorder %s27, 0
        %s263 = scalar_select %p262, %s27, 0
        %s264 = scalar_lea.vmem %s3, %s263
        %p265 = pneg %p133
        %p266 = pneg %p130
        %p267 = pneg %p161
        %p268 = pneg %p158
        %s269 = sand.u32 %s148, 1
        %s270 = scalar_lea.sflag [#allocation4], %s269
        %s271 = sand.u32 %s148, 1
        %s272 = smul.addr %s271, 32
        %s273 = scalar_lea.vmem [#allocation7], %s272
        %p274 = scmp.lt.s32.totalorder %s27, 0
        %s275 = scalar_select %p274, %s27, 0
        %s276 = scalar_lea.vmem %s2, %s275
        %p277 = scmp.lt.s32.totalorder %s27, 0
        %s278 = scalar_select %p277, %s27, 0
        %s279 = scalar_lea.vmem %s3, %s278
        %s280 = smul.u32 8, %s26
        %v282 = vld [vmem:[%s239] sm:$0xf]
        %v283 = vld [vmem:[%s239 + $0x4] sm:$0xf]
        %v284 = vld [vmem:[%s239 + $0x8] sm:$0xf]
        %v285 = vld [vmem:[%s239 + $0xc] sm:$0xf]
        %v286 = vld [vmem:[%s239 + $0x10] sm:$0xf]
        %v287 = vld [vmem:[%s239 + $0x14] sm:$0xf]
        %v288 = vld [vmem:[%s239 + $0x18] sm:$0xf]
        %v289 = vld [vmem:[%s239 + $0x1c] sm:$0xf]
        %v290 = vld [vmem:[#allocation5] sm:$0xf]
        %v291 = vld [vmem:[#allocation5 + $0x4] sm:$0xf]
        %v292 = vld [vmem:[#allocation5 + $0x8] sm:$0xf]
        %v293 = vld [vmem:[#allocation5 + $0xc] sm:$0xf]
        %v294 = vld [vmem:[#allocation5 + $0x10] sm:$0xf]
        %v295 = vld [vmem:[#allocation5 + $0x14] sm:$0xf]
        %v296 = vld [vmem:[#allocation5 + $0x18] sm:$0xf]
        %v297 = vld [vmem:[#allocation5 + $0x1c] sm:$0xf]
        %v298 = vld [vmem:[#allocation5 + $0x20] sm:$0xf]
        %v299 = vld [vmem:[#allocation5 + $0x24] sm:$0xf]
        %v300 = vld [vmem:[#allocation5 + $0x28] sm:$0xf]
        %v301 = vld [vmem:[#allocation5 + $0x2c] sm:$0xf]
        %v302 = vld [vmem:[#allocation5 + $0x30] sm:$0xf]
        %v303 = vld [vmem:[#allocation5 + $0x34] sm:$0xf]
        %v304 = vld [vmem:[#allocation5 + $0x38] sm:$0xf]
        %v305 = vld [vmem:[#allocation5 + $0x3c] sm:$0xf]
        %v306 = vld [vmem:[%s239 + $0x20] sm:$0x1]
        %s307 = scalar_lea.vmem [#allocation5], 64
        %v308 = vld [vmem:[%s307] sm:$0xf]
        %v309 = vld [vmem:[%s307 + $0x4] sm:$0xf]
        %v310 = vld [vmem:[%s307 + $0x8] sm:$0xf]
        %v311 = vld [vmem:[%s307 + $0xc] sm:$0xf]
        %v312 = vld [vmem:[%s307 + $0x10] sm:$0xf]
        %v313 = vld [vmem:[%s307 + $0x14] sm:$0xf]
        %v314 = vld [vmem:[%s307 + $0x18] sm:$0xf]
        %v315 = vld [vmem:[%s307 + $0x1c] sm:$0xf]
        %v316 = vld [vmem:[%s307 + $0x20] sm:$0xf]
        %v317 = vld [vmem:[%s307 + $0x24] sm:$0xf]
        %v318 = vld [vmem:[%s307 + $0x28] sm:$0xf]
        %v319 = vld [vmem:[%s307 + $0x2c] sm:$0xf]
        %v320 = vld [vmem:[%s307 + $0x30] sm:$0xf]
        %v321 = vld [vmem:[%s307 + $0x34] sm:$0xf]
        %v322 = vld [vmem:[%s307 + $0x38] sm:$0xf]
        %v323 = vld [vmem:[%s307 + $0x3c] sm:$0xf]
        %v333 = vunpack.c.l.b16 %v282
        %v334 = vunpack.c.l.b16 %v283
        %v335 = vunpack.c.l.b16 %v284
        %v336 = vunpack.c.l.b16 %v285
        %v337 = vunpack.c.l.b16 %v286
        %v338 = vunpack.c.l.b16 %v287
        %v339 = vunpack.c.l.b16 %v288
        %v340 = vunpack.c.l.b16 %v289
        %v341 = vunpack.c.l.b16 %v306
        %v342 = vpack.c.b16 %v334, %v333
        %v343 = vpack.c.b16 %v336, %v335
        %v344 = vpack.c.b16 %v338, %v337
        %v345 = vpack.c.b16 %v340, %v339
        %v346 = vpack.c.b16 %v341, %v341
        %vm347 = vsmask.f32 7424
        %v349 = vshrl.u32 %v342, 16
        %v351 = vshll.u32 %v342, 16
        %v353 = vrot.slane %v351, 1
        %v354 = vor.u32 %v349, %v353
        %v356 = vshll.u32 %v343, 16
        %v358 = vrot.slane %v356, 1
        %v359 = vsel %vm347, %v354, %v358
        %v360 = vshrl.u32 %v343, 16
        %v362 = vor.u32 %v360, %v358
        %v364 = vshll.u32 %v344, 16
        %v366 = vrot.slane %v364, 1
        %v367 = vsel %vm347, %v362, %v366
        %v368 = vshrl.u32 %v344, 16
        %v370 = vor.u32 %v368, %v366
        %v372 = vshll.u32 %v345, 16
        %v374 = vrot.slane %v372, 1
        %v375 = vsel %vm347, %v370, %v374
        %v376 = vshrl.u32 %v345, 16
        %v378 = vor.u32 %v376, %v374
        %v380 = vshll.u32 %v346, 16
        %v382 = vrot.slane %v380, 1
        %v383 = vsel %vm347, %v378, %v382
        %v404 = vunpack.c.l.b16 %v308
        %v405 = vunpack.c.l.b16 %v309
        %v406 = vunpack.c.l.b16 %v310
        %v407 = vunpack.c.l.b16 %v311
        %v408 = vunpack.c.l.b16 %v312
        %v409 = vunpack.c.l.b16 %v313
        %v410 = vunpack.c.l.b16 %v314
        %v411 = vunpack.c.l.b16 %v315
        %v412 = vunpack.c.l.b16 %v316
        %v413 = vunpack.c.l.b16 %v317
        %v414 = vunpack.c.l.b16 %v318
        %v415 = vunpack.c.l.b16 %v319
        %v416 = vunpack.c.l.b16 %v320
        %v417 = vunpack.c.l.b16 %v321
        %v418 = vunpack.c.l.b16 %v322
        %v419 = vunpack.c.l.b16 %v323
        %v420 = vpack.c.b16 %v405, %v404
        %v421 = vpack.c.b16 %v407, %v406
        %v422 = vpack.c.b16 %v409, %v408
        %v423 = vpack.c.b16 %v411, %v410
        %v424 = vpack.c.b16 %v413, %v412
        %v425 = vpack.c.b16 %v415, %v414
        %v426 = vpack.c.b16 %v417, %v416
        %v427 = vpack.c.b16 %v419, %v418
        %436 = vmatprep.subr.bf16.mxu0 0
        %437 = vmatpush1.bf16.msra.mxu0 %v420
        %438 = vmatprep.subr.bf16.mxu0 0
        %439 = vmatpush1.bf16.msra.mxu0 %v421
        %440 = vmatprep.subr.bf16.mxu0 0
        %441 = vmatpush1.bf16.msra.mxu0 %v422
        %442 = vmatprep.subr.bf16.mxu0 0
        %443 = vmatpush1.bf16.msra.mxu0 %v423
        %444 = vmatprep.subr.bf16.mxu0 0
        %445 = vmatpush1.bf16.msra.mxu0 %v424
        %446 = vmatprep.subr.bf16.mxu0 0
        %447 = vmatpush1.bf16.msra.mxu0 %v425
        %448 = vmatprep.subr.bf16.mxu0 0
        %449 = vmatpush1.bf16.msra.mxu0 %v426
        %450 = vmatprep.subr.bf16.mxu0 0
        %451 = vmatpush1.bf16.msra.mxu0 %v427
        %452 = vmatprep.subr.bf16.mxu0 0
        %453 = vmatpush1.bf16.msra.mxu0 0
        %454 = vmatprep.subr.bf16.mxu0 0
        %455 = vmatpush1.bf16.msra.mxu0 0
        %456 = vmatprep.subr.bf16.mxu0 0
        %457 = vmatpush1.bf16.msra.mxu0 0
        %458 = vmatprep.subr.bf16.mxu0 0
        %459 = vmatpush1.bf16.msra.mxu0 0
        %460 = vmatprep.subr.bf16.mxu0 0
        %461 = vmatpush1.bf16.msra.mxu0 0
        %462 = vmatprep.subr.bf16.mxu0 0
        %463 = vmatpush1.bf16.msra.mxu0 0
        %464 = vmatprep.subr.bf16.mxu0 0
        %465 = vmatpush1.bf16.msra.mxu0 0
        %466 = vmatprep.subr.bf16.mxu0 0
        %467 = vmatpush1.bf16.msra.mxu0 0
        %468 = vmatprep.mubr.bf16.mxu0 0
        %469 = vmatmul.mubr.bf16.gmra.mrb[0].mxu0 %v359
        %v470 = vpop.f32.mrb[0].mxu0
        %v471 = vadd.f32 0.0, %v470
        %v472 = vpop.f32.mrb[0].mxu0
        %v473 = vpop.f32.mrb[0].mxu0
        %v474 = vadd.f32 0.0, %v473
        %v475 = vpop.f32.mrb[0].mxu0
        %476 = vmatprep.mubr.bf16.mxu0 0
        %477 = vmatmul.mubr.bf16.gmra.mrb[0].mxu0 %v367
        %v478 = vpop.f32.mrb[0].mxu0
        %v479 = vadd.f32 0.0, %v478
        %v480 = vpop.f32.mrb[0].mxu0
        %v481 = vpop.f32.mrb[0].mxu0
        %v482 = vadd.f32 0.0, %v481
        %v483 = vpop.f32.mrb[0].mxu0
        %484 = vmatprep.mubr.bf16.mxu0 0
        %485 = vmatmul.mubr.bf16.gmra.mrb[0].mxu0 %v375
        %v486 = vpop.f32.mrb[0].mxu0
        %v487 = vadd.f32 0.0, %v486
        %v488 = vpop.f32.mrb[0].mxu0
        %v489 = vpop.f32.mrb[0].mxu0
        %v490 = vadd.f32 0.0, %v489
        %v491 = vpop.f32.mrb[0].mxu0
        %492 = vmatprep.mubr.bf16.mxu0 0
        %493 = vmatmul.mubr.bf16.gmra.mrb[0].mxu0 %v383
        %v494 = vpop.f32.mrb[0].mxu0
        %v495 = vadd.f32 0.0, %v494
        %v496 = vpop.f32.mrb[0].mxu0
        %v497 = vpop.f32.mrb[0].mxu0
        %v498 = vadd.f32 0.0, %v497
        %v499 = vpop.f32.mrb[0].mxu0
        %500 = vdwg.mxu0
        %v521 = vunpack.c.l.b16 %v290
        %v522 = vunpack.c.l.b16 %v291
        %v523 = vunpack.c.l.b16 %v292
        %v524 = vunpack.c.l.b16 %v293
        %v525 = vunpack.c.l.b16 %v294
        %v526 = vunpack.c.l.b16 %v295
        %v527 = vunpack.c.l.b16 %v296
        %v528 = vunpack.c.l.b16 %v297
        %v529 = vunpack.c.l.b16 %v298
        %v530 = vunpack.c.l.b16 %v299
        %v531 = vunpack.c.l.b16 %v300
        %v532 = vunpack.c.l.b16 %v301
        %v533 = vunpack.c.l.b16 %v302
        %v534 = vunpack.c.l.b16 %v303
        %v535 = vunpack.c.l.b16 %v304
        %v536 = vunpack.c.l.b16 %v305
        %v537 = vpack.c.b16 %v522, %v521
        %v538 = vpack.c.b16 %v524, %v523
        %v539 = vpack.c.b16 %v526, %v525
        %v540 = vpack.c.b16 %v528, %v527
        %v541 = vpack.c.b16 %v530, %v529
        %v542 = vpack.c.b16 %v532, %v531
        %v543 = vpack.c.b16 %v534, %v533
        %v544 = vpack.c.b16 %v536, %v535
        %553 = vmatprep.subr.bf16.mxu0 0
        %554 = vmatpush1.bf16.msra.mxu0 %v537
        %555 = vmatprep.subr.bf16.mxu0 0
        %556 = vmatpush1.bf16.msra.mxu0 %v538
        %557 = vmatprep.subr.bf16.mxu0 0
        %558 = vmatpush1.bf16.msra.mxu0 %v539
        %559 = vmatprep.subr.bf16.mxu0 0
        %560 = vmatpush1.bf16.msra.mxu0 %v540
        %561 = vmatprep.subr.bf16.mxu0 0
        %562 = vmatpush1.bf16.msra.mxu0 %v541
        %563 = vmatprep.subr.bf16.mxu0 0
        %564 = vmatpush1.bf16.msra.mxu0 %v542
        %565 = vmatprep.subr.bf16.mxu0 0
        %566 = vmatpush1.bf16.msra.mxu0 %v543
        %567 = vmatprep.subr.bf16.mxu0 0
        %568 = vmatpush1.bf16.msra.mxu0 %v544
        %569 = vmatprep.subr.bf16.mxu0 0
        %570 = vmatpush1.bf16.msra.mxu0 0
        %571 = vmatprep.subr.bf16.mxu0 0
        %572 = vmatpush1.bf16.msra.mxu0 0
        %573 = vmatprep.subr.bf16.mxu0 0
        %574 = vmatpush1.bf16.msra.mxu0 0
        %575 = vmatprep.subr.bf16.mxu0 0
        %576 = vmatpush1.bf16.msra.mxu0 0
        %577 = vmatprep.subr.bf16.mxu0 0
        %578 = vmatpush1.bf16.msra.mxu0 0
        %579 = vmatprep.subr.bf16.mxu0 0
        %580 = vmatpush1.bf16.msra.mxu0 0
        %581 = vmatprep.subr.bf16.mxu0 0
        %582 = vmatpush1.bf16.msra.mxu0 0
        %583 = vmatprep.subr.bf16.mxu0 0
        %584 = vmatpush1.bf16.msra.mxu0 0
        %585 = vmatprep.mubr.bf16.mxu0 0
        %586 = vmatmul.mubr.bf16.gmra.mrb[0].mxu0 %v342
        %v587 = vpop.f32.mrb[0].mxu0
        %v588 = vadd.f32 %v471, %v587
        %v589 = vpop.f32.mrb[0].mxu0
        %v590 = vpop.f32.mrb[0].mxu0
        %v591 = vadd.f32 %v474, %v590
        %v592 = vpop.f32.mrb[0].mxu0
        %593 = vmatprep.mubr.bf16.mxu0 0
        %594 = vmatmul.mubr.bf16.gmra.mrb[0].mxu0 %v343
        %v595 = vpop.f32.mrb[0].mxu0
        %v596 = vadd.f32 %v479, %v595
        %v597 = vpop.f32.mrb[0].mxu0
        %v598 = vpop.f32.mrb[0].mxu0
        %v599 = vadd.f32 %v482, %v598
        %v600 = vpop.f32.mrb[0].mxu0
        %601 = vmatprep.mubr.bf16.mxu0 0
        %602 = vmatmul.mubr.bf16.gmra.mrb[0].mxu0 %v344
        %v603 = vpop.f32.mrb[0].mxu0
        %v604 = vadd.f32 %v487, %v603
        %v605 = vpop.f32.mrb[0].mxu0
        %v606 = vpop.f32.mrb[0].mxu0
        %v607 = vadd.f32 %v490, %v606
        %v608 = vpop.f32.mrb[0].mxu0
        %609 = vmatprep.mubr.bf16.mxu0 0
        %610 = vmatmul.mubr.bf16.gmra.mrb[0].mxu0 %v345
        %v611 = vpop.f32.mrb[0].mxu0
        %v612 = vadd.f32 %v495, %v611
        %v613 = vpop.f32.mrb[0].mxu0
        %v614 = vpop.f32.mrb[0].mxu0
        %v615 = vadd.f32 %v498, %v614
        %v616 = vpop.f32.mrb[0].mxu0
        %617 = vdwg.mxu0
        %v618 = vld [vmem:[%s239] sm:$0xe]
        %s619 = scalar_lea.vmem [#allocation5], 128
        %v620 = vld [vmem:[%s619] sm:$0xf]
        %v621 = vld [vmem:[%s619 + $0x4] sm:$0xf]
        %v622 = vld [vmem:[%s619 + $0x8] sm:$0xf]
        %v623 = vld [vmem:[%s619 + $0xc] sm:$0xf]
        %v624 = vld [vmem:[%s619 + $0x10] sm:$0xf]
        %v625 = vld [vmem:[%s619 + $0x14] sm:$0xf]
        %v626 = vld [vmem:[%s619 + $0x18] sm:$0xf]
        %v627 = vld [vmem:[%s619 + $0x1c] sm:$0xf]
        %v628 = vld [vmem:[%s619 + $0x20] sm:$0xf]
        %v629 = vld [vmem:[%s619 + $0x24] sm:$0xf]
        %v630 = vld [vmem:[%s619 + $0x28] sm:$0xf]
        %v631 = vld [vmem:[%s619 + $0x2c] sm:$0xf]
        %v632 = vld [vmem:[%s619 + $0x30] sm:$0xf]
        %v633 = vld [vmem:[%s619 + $0x34] sm:$0xf]
        %v634 = vld [vmem:[%s619 + $0x38] sm:$0xf]
        %v635 = vld [vmem:[%s619 + $0x3c] sm:$0xf]
        %v637 = vunpack.c.l.b16 %v618
        %v638 = vpack.c.b16 %v334, %v637
        %vm639 = vcmask 1046528
        %v640 = vrot.slane %v638, 1
        %v641 = vrot.slane %v343, 1
        %v642 = vsel %vm639, %v640, %v641
        %v643 = vrot.slane %v344, 1
        %v644 = vsel %vm639, %v641, %v643
        %v645 = vrot.slane %v345, 1
        %v646 = vsel %vm639, %v643, %v645
        %v647 = vrot.slane %v346, 1
        %v648 = vsel %vm639, %v645, %v647
        %v669 = vunpack.c.l.b16 %v620
        %v670 = vunpack.c.l.b16 %v621
        %v671 = vunpack.c.l.b16 %v622
        %v672 = vunpack.c.l.b16 %v623
        %v673 = vunpack.c.l.b16 %v624
        %v674 = vunpack.c.l.b16 %v625
        %v675 = vunpack.c.l.b16 %v626
        %v676 = vunpack.c.l.b16 %v627
        %v677 = vunpack.c.l.b16 %v628
        %v678 = vunpack.c.l.b16 %v629
        %v679 = vunpack.c.l.b16 %v630
        %v680 = vunpack.c.l.b16 %v631
        %v681 = vunpack.c.l.b16 %v632
        %v682 = vunpack.c.l.b16 %v633
        %v683 = vunpack.c.l.b16 %v634
        %v684 = vunpack.c.l.b16 %v635
        %v685 = vpack.c.b16 %v670, %v669
        %v686 = vpack.c.b16 %v672, %v671
        %v687 = vpack.c.b16 %v674, %v673
        %v688 = vpack.c.b16 %v676, %v675
        %v689 = vpack.c.b16 %v678, %v677
        %v690 = vpack.c.b16 %v680, %v679
        %v691 = vpack.c.b16 %v682, %v681
        %v692 = vpack.c.b16 %v684, %v683
        %701 = vmatprep.subr.bf16.mxu0 0
        %702 = vmatpush1.bf16.msra.mxu0 %v685
        %703 = vmatprep.subr.bf16.mxu0 0
        %704 = vmatpush1.bf16.msra.mxu0 %v686
        %705 = vmatprep.subr.bf16.mxu0 0
        %706 = vmatpush1.bf16.msra.mxu0 %v687
        %707 = vmatprep.subr.bf16.mxu0 0
        %708 = vmatpush1.bf16.msra.mxu0 %v688
        %709 = vmatprep.subr.bf16.mxu0 0
        %710 = vmatpush1.bf16.msra.mxu0 %v689
        %711 = vmatprep.subr.bf16.mxu0 0
        %712 = vmatpush1.bf16.msra.mxu0 %v690
        %713 = vmatprep.subr.bf16.mxu0 0
        %714 = vmatpush1.bf16.msra.mxu0 %v691
        %715 = vmatprep.subr.bf16.mxu0 0
        %716 = vmatpush1.bf16.msra.mxu0 %v692
        %717 = vmatprep.subr.bf16.mxu0 0
        %718 = vmatpush1.bf16.msra.mxu0 0
        %719 = vmatprep.subr.bf16.mxu0 0
        %720 = vmatpush1.bf16.msra.mxu0 0
        %721 = vmatprep.subr.bf16.mxu0 0
        %722 = vmatpush1.bf16.msra.mxu0 0
        %723 = vmatprep.subr.bf16.mxu0 0
        %724 = vmatpush1.bf16.msra.mxu0 0
        %725 = vmatprep.subr.bf16.mxu0 0
        %726 = vmatpush1.bf16.msra.mxu0 0
        %727 = vmatprep.subr.bf16.mxu0 0
        %728 = vmatpush1.bf16.msra.mxu0 0
        %729 = vmatprep.subr.bf16.mxu0 0
        %730 = vmatpush1.bf16.msra.mxu0 0
        %731 = vmatprep.subr.bf16.mxu0 0
        %732 = vmatpush1.bf16.msra.mxu0 0
        %733 = vmatprep.mubr.bf16.mxu0 0
        %734 = vmatmul.mubr.bf16.gmra.mrb[0].mxu0 %v642
        %v735 = vpop.f32.mrb[0].mxu0
        %v736 = vadd.f32 0.0, %v735
        %v737 = vpop.f32.mrb[0].mxu0
        %v738 = vpop.f32.mrb[0].mxu0
        %v739 = vadd.f32 0.0, %v738
        %v740 = vpop.f32.mrb[0].mxu0
        %741 = vmatprep.mubr.bf16.mxu0 0
        %742 = vmatmul.mubr.bf16.gmra.mrb[0].mxu0 %v644
        %v743 = vpop.f32.mrb[0].mxu0
        %v744 = vadd.f32 0.0, %v743
        %v745 = vpop.f32.mrb[0].mxu0
        %v746 = vpop.f32.mrb[0].mxu0
        %v747 = vadd.f32 0.0, %v746
        %v748 = vpop.f32.mrb[0].mxu0
        %749 = vmatprep.mubr.bf16.mxu0 0
        %750 = vmatmul.mubr.bf16.gmra.mrb[0].mxu0 %v646
        %v751 = vpop.f32.mrb[0].mxu0
        %v752 = vadd.f32 0.0, %v751
        %v753 = vpop.f32.mrb[0].mxu0
        %v754 = vpop.f32.mrb[0].mxu0
        %v755 = vadd.f32 0.0, %v754
        %v756 = vpop.f32.mrb[0].mxu0
        %757 = vmatprep.mubr.bf16.mxu0 0
        %758 = vmatmul.mubr.bf16.gmra.mrb[0].mxu0 %v648
        %v759 = vpop.f32.mrb[0].mxu0
        %v760 = vadd.f32 0.0, %v759
        %v761 = vpop.f32.mrb[0].mxu0
        %v762 = vpop.f32.mrb[0].mxu0
        %v763 = vadd.f32 0.0, %v762
        %v764 = vpop.f32.mrb[0].mxu0
        %765 = vdwg.mxu0
        %v766 = vadd.f32 %v588, %v736
        %v767 = vadd.f32 %v591, %v739
        %v768 = vadd.f32 %v596, %v744
        %v769 = vadd.f32 %v599, %v747
        %v770 = vadd.f32 %v604, %v752
        %v771 = vadd.f32 %v607, %v755
        %v772 = vadd.f32 %v612, %v760
        %v773 = vadd.f32 %v615, %v763
        %v774 = vld [vmem:[%s239 + $0x4] sm:$0xe]
        %v775 = vld [vmem:[%s239 + $0x8] sm:$0xf]
        %v776 = vld [vmem:[%s239 + $0xc] sm:$0xf]
        %v777 = vld [vmem:[%s239 + $0x10] sm:$0xf]
        %v778 = vld [vmem:[%s239 + $0x14] sm:$0xf]
        %v779 = vld [vmem:[%s239 + $0x18] sm:$0xf]
        %v780 = vld [vmem:[%s239 + $0x1c] sm:$0xf]
        %v781 = vld [vmem:[%s239 + $0x20] sm:$0xf]
        %v782 = vld [vmem:[%s239 + $0x24] sm:$0x3]
        %s783 = scalar_lea.vmem [#allocation5], 192
        %v784 = vld [vmem:[%s783] sm:$0xf]
        %v785 = vld [vmem:[%s783 + $0x4] sm:$0xf]
        %v786 = vld [vmem:[%s783 + $0x8] sm:$0xf]
        %v787 = vld [vmem:[%s783 + $0xc] sm:$0xf]
        %v788 = vld [vmem:[%s783 + $0x10] sm:$0xf]
        %v789 = vld [vmem:[%s783 + $0x14] sm:$0xf]
        %v790 = vld [vmem:[%s783 + $0x18] sm:$0xf]
        %v791 = vld [vmem:[%s783 + $0x1c] sm:$0xf]
        %v792 = vld [vmem:[%s783 + $0x20] sm:$0xf]
        %v793 = vld [vmem:[%s783 + $0x24] sm:$0xf]
        %v794 = vld [vmem:[%s783 + $0x28] sm:$0xf]
        %v795 = vld [vmem:[%s783 + $0x2c] sm:$0xf]
        %v796 = vld [vmem:[%s783 + $0x30] sm:$0xf]
        %v797 = vld [vmem:[%s783 + $0x34] sm:$0xf]
        %v798 = vld [vmem:[%s783 + $0x38] sm:$0xf]
        %v799 = vld [vmem:[%s783 + $0x3c] sm:$0xf]
        %v809 = vunpack.c.l.b16 %v774
        %v810 = vunpack.c.l.b16 %v775
        %v811 = vunpack.c.l.b16 %v776
        %v812 = vunpack.c.l.b16 %v777
        %v813 = vunpack.c.l.b16 %v778
        %v814 = vunpack.c.l.b16 %v779
        %v815 = vunpack.c.l.b16 %v780
        %v816 = vunpack.c.l.b16 %v781
        %v817 = vunpack.c.l.b16 %v782
        %v818 = vpack.c.b16 %v810, %v809
        %v819 = vpack.c.b16 %v812, %v811
        %v820 = vpack.c.b16 %v814, %v813
        %v821 = vpack.c.b16 %v816, %v815
        %v822 = vpack.c.b16 %v817, %v817
        %vm823 = vsmask.f32 6400
        %v825 = vshrl.u32 %v818, 16
        %v827 = vrot.slane %v825, 1
        %v828 = vshll.u32 %v818, 16
        %v830 = vrot.slane %v828, 2
        %v831 = vor.u32 %v827, %v830
        %v833 = vshrl.u32 %v819, 16
        %v835 = vrot.slane %v833, 1
        %v836 = vshll.u32 %v819, 16
        %v838 = vrot.slane %v836, 2
        %v839 = vor.u32 %v835, %v838
        %v840 = vsel %vm823, %v831, %v839
        %v842 = vshrl.u32 %v820, 16
        %v844 = vrot.slane %v842, 1
        %v845 = vshll.u32 %v820, 16
        %v847 = vrot.slane %v845, 2
        %v848 = vor.u32 %v844, %v847
        %v849 = vsel %vm823, %v839, %v848
        %v851 = vshrl.u32 %v821, 16
        %v853 = vrot.slane %v851, 1
        %v854 = vshll.u32 %v821, 16
        %v856 = vrot.slane %v854, 2
        %v857 = vor.u32 %v853, %v856
        %v858 = vsel %vm823, %v848, %v857
        %v860 = vshrl.u32 %v822, 16
        %v862 = vrot.slane %v860, 1
        %v863 = vshll.u32 %v822, 16
        %v865 = vrot.slane %v863, 2
        %v866 = vor.u32 %v862, %v865
        %v867 = vsel %vm823, %v857, %v866
        %v888 = vunpack.c.l.b16 %v784
        %v889 = vunpack.c.l.b16 %v785
        %v890 = vunpack.c.l.b16 %v786
        %v891 = vunpack.c.l.b16 %v787
        %v892 = vunpack.c.l.b16 %v788
        %v893 = vunpack.c.l.b16 %v789
        %v894 = vunpack.c.l.b16 %v790
        %v895 = vunpack.c.l.b16 %v791
        %v896 = vunpack.c.l.b16 %v792
        %v897 = vunpack.c.l.b16 %v793
        %v898 = vunpack.c.l.b16 %v794
        %v899 = vunpack.c.l.b16 %v795
        %v900 = vunpack.c.l.b16 %v796
        %v901 = vunpack.c.l.b16 %v797
        %v902 = vunpack.c.l.b16 %v798
        %v903 = vunpack.c.l.b16 %v799
        %v904 = vpack.c.b16 %v889, %v888
        %v905 = vpack.c.b16 %v891, %v890
        %v906 = vpack.c.b16 %v893, %v892
        %v907 = vpack.c.b16 %v895, %v894
        %v908 = vpack.c.b16 %v897, %v896
        %v909 = vpack.c.b16 %v899, %v898
        %v910 = vpack.c.b16 %v901, %v900
        %v911 = vpack.c.b16 %v903, %v902
        %920 = vmatprep.subr.bf16.mxu0 0
        %921 = vmatpush1.bf16.msra.mxu0 %v904
        %922 = vmatprep.subr.bf16.mxu0 0
        %923 = vmatpush1.bf16.msra.mxu0 %v905
        %924 = vmatprep.subr.bf16.mxu0 0
        %925 = vmatpush1.bf16.msra.mxu0 %v906
        %926 = vmatprep.subr.bf16.mxu0 0
        %927 = vmatpush1.bf16.msra.mxu0 %v907
        %928 = vmatprep.subr.bf16.mxu0 0
        %929 = vmatpush1.bf16.msra.mxu0 %v908
        %930 = vmatprep.subr.bf16.mxu0 0
        %931 = vmatpush1.bf16.msra.mxu0 %v909
        %932 = vmatprep.subr.bf16.mxu0 0
        %933 = vmatpush1.bf16.msra.mxu0 %v910
        %934 = vmatprep.subr.bf16.mxu0 0
        %935 = vmatpush1.bf16.msra.mxu0 %v911
        %936 = vmatprep.subr.bf16.mxu0 0
        %937 = vmatpush1.bf16.msra.mxu0 0
        %938 = vmatprep.subr.bf16.mxu0 0
        %939 = vmatpush1.bf16.msra.mxu0 0
        %940 = vmatprep.subr.bf16.mxu0 0
        %941 = vmatpush1.bf16.msra.mxu0 0
        %942 = vmatprep.subr.bf16.mxu0 0
        %943 = vmatpush1.bf16.msra.mxu0 0
        %944 = vmatprep.subr.bf16.mxu0 0
        %945 = vmatpush1.bf16.msra.mxu0 0
        %946 = vmatprep.subr.bf16.mxu0 0
        %947 = vmatpush1.bf16.msra.mxu0 0
        %948 = vmatprep.subr.bf16.mxu0 0
        %949 = vmatpush1.bf16.msra.mxu0 0
        %950 = vmatprep.subr.bf16.mxu0 0
        %951 = vmatpush1.bf16.msra.mxu0 0
        %952 = vmatprep.mubr.bf16.mxu0 0
        %953 = vmatmul.mubr.bf16.gmra.mrb[0].mxu0 %v840
        %v954 = vpop.f32.mrb[0].mxu0
        %v955 = vadd.f32 0.0, %v954
        %v956 = vpop.f32.mrb[0].mxu0
        %v957 = vpop.f32.mrb[0].mxu0
        %v958 = vadd.f32 0.0, %v957
        %v959 = vpop.f32.mrb[0].mxu0
        %960 = vmatprep.mubr.bf16.mxu0 0
        %961 = vmatmul.mubr.bf16.gmra.mrb[0].mxu0 %v849
        %v962 = vpop.f32.mrb[0].mxu0
        %v963 = vadd.f32 0.0, %v962
        %v964 = vpop.f32.mrb[0].mxu0
        %v965 = vpop.f32.mrb[0].mxu0
        %v966 = vadd.f32 0.0, %v965
        %v967 = vpop.f32.mrb[0].mxu0
        %968 = vmatprep.mubr.bf16.mxu0 0
        %969 = vmatmul.mubr.bf16.gmra.mrb[0].mxu0 %v858
        %v970 = vpop.f32.mrb[0].mxu0
        %v971 = vadd.f32 0.0, %v970
        %v972 = vpop.f32.mrb[0].mxu0
        %v973 = vpop.f32.mrb[0].mxu0
        %v974 = vadd.f32 0.0, %v973
        %v975 = vpop.f32.mrb[0].mxu0
        %976 = vmatprep.mubr.bf16.mxu0 0
        %977 = vmatmul.mubr.bf16.gmra.mrb[0].mxu0 %v867
        %v978 = vpop.f32.mrb[0].mxu0
        %v979 = vadd.f32 0.0, %v978
        %v980 = vpop.f32.mrb[0].mxu0
        %v981 = vpop.f32.mrb[0].mxu0
        %v982 = vadd.f32 0.0, %v981
        %v983 = vpop.f32.mrb[0].mxu0
        %984 = vdwg.mxu0
        %v985 = vadd.f32 %v766, %v955
        %v986 = vadd.f32 %v767, %v958
        %v987 = vadd.f32 %v768, %v963
        %v988 = vadd.f32 %v769, %v966
        %v989 = vadd.f32 %v770, %v971
        %v990 = vadd.f32 %v771, %v974
        %v991 = vadd.f32 %v772, %v979
        %v992 = vadd.f32 %v773, %v982
        %v993 = vld [vmem:[%s239 + $0x4] sm:$0xc]
        %s994 = scalar_lea.vmem [#allocation5], 256
        %v995 = vld [vmem:[%s994] sm:$0xf]
        %v996 = vld [vmem:[%s994 + $0x4] sm:$0xf]
        %v997 = vld [vmem:[%s994 + $0x8] sm:$0xf]
        %v998 = vld [vmem:[%s994 + $0xc] sm:$0xf]
        %v999 = vld [vmem:[%s994 + $0x10] sm:$0xf]
        %v1000 = vld [vmem:[%s994 + $0x14] sm:$0xf]
        %v1001 = vld [vmem:[%s994 + $0x18] sm:$0xf]
        %v1002 = vld [vmem:[%s994 + $0x1c] sm:$0xf]
        %v1003 = vld [vmem:[%s994 + $0x20] sm:$0xf]
        %v1004 = vld [vmem:[%s994 + $0x24] sm:$0xf]
        %v1005 = vld [vmem:[%s994 + $0x28] sm:$0xf]
        %v1006 = vld [vmem:[%s994 + $0x2c] sm:$0xf]
        %v1007 = vld [vmem:[%s994 + $0x30] sm:$0xf]
        %v1008 = vld [vmem:[%s994 + $0x34] sm:$0xf]
        %v1009 = vld [vmem:[%s994 + $0x38] sm:$0xf]
        %v1010 = vld [vmem:[%s994 + $0x3c] sm:$0xf]
        %v1012 = vunpack.c.l.b16 %v993
        %v1013 = vpack.c.b16 %v810, %v1012
        %vm1014 = vcmask 1045504
        %v1015 = vrot.slane %v1013, 2
        %v1016 = vrot.slane %v819, 2
        %v1017 = vsel %vm1014, %v1015, %v1016
        %v1018 = vrot.slane %v820, 2
        %v1019 = vsel %vm1014, %v1016, %v1018
        %v1020 = vrot.slane %v821, 2
        %v1021 = vsel %vm1014, %v1018, %v1020
        %v1022 = vrot.slane %v822, 2
        %v1023 = vsel %vm1014, %v1020, %v1022
        %v1044 = vunpack.c.l.b16 %v995
        %v1045 = vunpack.c.l.b16 %v996
        %v1046 = vunpack.c.l.b16 %v997
        %v1047 = vunpack.c.l.b16 %v998
        %v1048 = vunpack.c.l.b16 %v999
        %v1049 = vunpack.c.l.b16 %v1000
        %v1050 = vunpack.c.l.b16 %v1001
        %v1051 = vunpack.c.l.b16 %v1002
        %v1052 = vunpack.c.l.b16 %v1003
        %v1053 = vunpack.c.l.b16 %v1004
        %v1054 = vunpack.c.l.b16 %v1005
        %v1055 = vunpack.c.l.b16 %v1006
        %v1056 = vunpack.c.l.b16 %v1007
        %v1057 = vunpack.c.l.b16 %v1008
        %v1058 = vunpack.c.l.b16 %v1009
        %v1059 = vunpack.c.l.b16 %v1010
        %v1060 = vpack.c.b16 %v1045, %v1044
        %v1061 = vpack.c.b16 %v1047, %v1046
        %v1062 = vpack.c.b16 %v1049, %v1048
        %v1063 = vpack.c.b16 %v1051, %v1050
        %v1064 = vpack.c.b16 %v1053, %v1052
        %v1065 = vpack.c.b16 %v1055, %v1054
        %v1066 = vpack.c.b16 %v1057, %v1056
        %v1067 = vpack.c.b16 %v1059, %v1058
        %1076 = vmatprep.subr.bf16.mxu0 0
        %1077 = vmatpush1.bf16.msra.mxu0 %v1060
        %1078 = vmatprep.subr.bf16.mxu0 0
        %1079 = vmatpush1.bf16.msra.mxu0 %v1061
        %1080 = vmatprep.subr.bf16.mxu0 0
        %1081 = vmatpush1.bf16.msra.mxu0 %v1062
        %1082 = vmatprep.subr.bf16.mxu0 0
        %1083 = vmatpush1.bf16.msra.mxu0 %v1063
        %1084 = vmatprep.subr.bf16.mxu0 0
        %1085 = vmatpush1.bf16.msra.mxu0 %v1064
        %1086 = vmatprep.subr.bf16.mxu0 0
        %1087 = vmatpush1.bf16.msra.mxu0 %v1065
        %1088 = vmatprep.subr.bf16.mxu0 0
        %1089 = vmatpush1.bf16.msra.mxu0 %v1066
        %1090 = vmatprep.subr.bf16.mxu0 0
        %1091 = vmatpush1.bf16.msra.mxu0 %v1067
        %1092 = vmatprep.subr.bf16.mxu0 0
        %1093 = vmatpush1.bf16.msra.mxu0 0
        %1094 = vmatprep.subr.bf16.mxu0 0
        %1095 = vmatpush1.bf16.msra.mxu0 0
        %1096 = vmatprep.subr.bf16.mxu0 0
        %1097 = vmatpush1.bf16.msra.mxu0 0
        %1098 = vmatprep.subr.bf16.mxu0 0
        %1099 = vmatpush1.bf16.msra.mxu0 0
        %1100 = vmatprep.subr.bf16.mxu0 0
        %1101 = vmatpush1.bf16.msra.mxu0 0
        %1102 = vmatprep.subr.bf16.mxu0 0
        %1103 = vmatpush1.bf16.msra.mxu0 0
        %1104 = vmatprep.subr.bf16.mxu0 0
        %1105 = vmatpush1.bf16.msra.mxu0 0
        %1106 = vmatprep.subr.bf16.mxu0 0
        %1107 = vmatpush1.bf16.msra.mxu0 0
        %1108 = vmatprep.mubr.bf16.mxu0 0
        %1109 = vmatmul.mubr.bf16.gmra.mrb[0].mxu0 %v1017
        %v1110 = vpop.f32.mrb[0].mxu0
        %v1111 = vadd.f32 0.0, %v1110
        %v1112 = vpop.f32.mrb[0].mxu0
        %v1113 = vpop.f32.mrb[0].mxu0
        %v1114 = vadd.f32 0.0, %v1113
        %v1115 = vpop.f32.mrb[0].mxu0
        %1116 = vmatprep.mubr.bf16.mxu0 0
        %1117 = vmatmul.mubr.bf16.gmra.mrb[0].mxu0 %v1019
        %v1118 = vpop.f32.mrb[0].mxu0
        %v1119 = vadd.f32 0.0, %v1118
        %v1120 = vpop.f32.mrb[0].mxu0
        %v1121 = vpop.f32.mrb[0].mxu0
        %v1122 = vadd.f32 0.0, %v1121
        %v1123 = vpop.f32.mrb[0].mxu0
        %1124 = vmatprep.mubr.bf16.mxu0 0
        %1125 = vmatmul.mubr.bf16.gmra.mrb[0].mxu0 %v1021
        %v1126 = vpop.f32.mrb[0].mxu0
        %v1127 = vadd.f32 0.0, %v1126
        %v1128 = vpop.f32.mrb[0].mxu0
        %v1129 = vpop.f32.mrb[0].mxu0
        %v1130 = vadd.f32 0.0, %v1129
        %v1131 = vpop.f32.mrb[0].mxu0
        %1132 = vmatprep.mubr.bf16.mxu0 0
        %1133 = vmatmul.mubr.bf16.gmra.mrb[0].mxu0 %v1023
        %v1134 = vpop.f32.mrb[0].mxu0
        %v1135 = vadd.f32 0.0, %v1134
        %v1136 = vpop.f32.mrb[0].mxu0
        %v1137 = vpop.f32.mrb[0].mxu0
        %v1138 = vadd.f32 0.0, %v1137
        %v1139 = vpop.f32.mrb[0].mxu0
        %1140 = vdwg.mxu0
        %v1141 = vadd.f32 %v985, %v1111
        %v1142 = vadd.f32 %v986, %v1114
        %v1143 = vadd.f32 %v987, %v1119
        %v1144 = vadd.f32 %v988, %v1122
        %v1145 = vadd.f32 %v989, %v1127
        %v1146 = vadd.f32 %v990, %v1130
        %v1147 = vadd.f32 %v991, %v1135
        %v1148 = vadd.f32 %v992, %v1138
        %v1149 = vld [vmem:[%s239 + $0x24] sm:$0x7]
        %s1150 = scalar_lea.vmem [#allocation5], 320
        %v1151 = vld [vmem:[%s1150] sm:$0xf]
        %v1152 = vld [vmem:[%s1150 + $0x4] sm:$0xf]
        %v1153 = vld [vmem:[%s1150 + $0x8] sm:$0xf]
        %v1154 = vld [vmem:[%s1150 + $0xc] sm:$0xf]
        %v1155 = vld [vmem:[%s1150 + $0x10] sm:$0xf]
        %v1156 = vld [vmem:[%s1150 + $0x14] sm:$0xf]
        %v1157 = vld [vmem:[%s1150 + $0x18] sm:$0xf]
        %v1158 = vld [vmem:[%s1150 + $0x1c] sm:$0xf]
        %v1159 = vld [vmem:[%s1150 + $0x20] sm:$0xf]
        %v1160 = vld [vmem:[%s1150 + $0x24] sm:$0xf]
        %v1161 = vld [vmem:[%s1150 + $0x28] sm:$0xf]
        %v1162 = vld [vmem:[%s1150 + $0x2c] sm:$0xf]
        %v1163 = vld [vmem:[%s1150 + $0x30] sm:$0xf]
        %v1164 = vld [vmem:[%s1150 + $0x34] sm:$0xf]
        %v1165 = vld [vmem:[%s1150 + $0x38] sm:$0xf]
        %v1166 = vld [vmem:[%s1150 + $0x3c] sm:$0xf]
        %v1168 = vunpack.c.l.b16 %v1149
        %v1169 = vpack.c.b16 %v1168, %v1168
        %vm1170 = vsmask.f32 5376
        %v1172 = vshrl.u32 %v1013, 16
        %v1174 = vrot.slane %v1172, 2
        %v1175 = vshll.u32 %v1013, 16
        %v1177 = vrot.slane %v1175, 3
        %v1178 = vor.u32 %v1174, %v1177
        %v1179 = vrot.slane %v833, 2
        %v1180 = vrot.slane %v836, 3
        %v1181 = vor.u32 %v1179, %v1180
        %v1182 = vsel %vm1170, %v1178, %v1181
        %v1183 = vrot.slane %v842, 2
        %v1184 = vrot.slane %v845, 3
        %v1185 = vor.u32 %v1183, %v1184
        %v1186 = vsel %vm1170, %v1181, %v1185
        %v1187 = vrot.slane %v851, 2
        %v1188 = vrot.slane %v854, 3
        %v1189 = vor.u32 %v1187, %v1188
        %v1190 = vsel %vm1170, %v1185, %v1189
        %v1192 = vshrl.u32 %v1169, 16
        %v1194 = vrot.slane %v1192, 2
        %v1195 = vshll.u32 %v1169, 16
        %v1197 = vrot.slane %v1195, 3
        %v1198 = vor.u32 %v1194, %v1197
        %v1199 = vsel %vm1170, %v1189, %v1198
        %v1220 = vunpack.c.l.b16 %v1151
        %v1221 = vunpack.c.l.b16 %v1152
        %v1222 = vunpack.c.l.b16 %v1153
        %v1223 = vunpack.c.l.b16 %v1154
        %v1224 = vunpack.c.l.b16 %v1155
        %v1225 = vunpack.c.l.b16 %v1156
        %v1226 = vunpack.c.l.b16 %v1157
        %v1227 = vunpack.c.l.b16 %v1158
        %v1228 = vunpack.c.l.b16 %v1159
        %v1229 = vunpack.c.l.b16 %v1160
        %v1230 = vunpack.c.l.b16 %v1161
        %v1231 = vunpack.c.l.b16 %v1162
        %v1232 = vunpack.c.l.b16 %v1163
        %v1233 = vunpack.c.l.b16 %v1164
        %v1234 = vunpack.c.l.b16 %v1165
        %v1235 = vunpack.c.l.b16 %v1166
        %v1236 = vpack.c.b16 %v1221, %v1220
        %v1237 = vpack.c.b16 %v1223, %v1222
        %v1238 = vpack.c.b16 %v1225, %v1224
        %v1239 = vpack.c.b16 %v1227, %v1226
        %v1240 = vpack.c.b16 %v1229, %v1228
        %v1241 = vpack.c.b16 %v1231, %v1230
        %v1242 = vpack.c.b16 %v1233, %v1232
        %v1243 = vpack.c.b16 %v1235, %v1234
        %1252 = vmatprep.subr.bf16.mxu0 0
        %1253 = vmatpush1.bf16.msra.mxu0 %v1236
        %1254 = vmatprep.subr.bf16.mxu0 0
        %1255 = vmatpush1.bf16.msra.mxu0 %v1237
        %1256 = vmatprep.subr.bf16.mxu0 0
        %1257 = vmatpush1.bf16.msra.mxu0 %v1238
        %1258 = vmatprep.subr.bf16.mxu0 0
        %1259 = vmatpush1.bf16.msra.mxu0 %v1239
        %1260 = vmatprep.subr.bf16.mxu0 0
        %1261 = vmatpush1.bf16.msra.mxu0 %v1240
        %1262 = vmatprep.subr.bf16.mxu0 0
        %1263 = vmatpush1.bf16.msra.mxu0 %v1241
        %1264 = vmatprep.subr.bf16.mxu0 0
        %1265 = vmatpush1.bf16.msra.mxu0 %v1242
        %1266 = vmatprep.subr.bf16.mxu0 0
        %1267 = vmatpush1.bf16.msra.mxu0 %v1243
        %1268 = vmatprep.subr.bf16.mxu0 0
        %1269 = vmatpush1.bf16.msra.mxu0 0
        %1270 = vmatprep.subr.bf16.mxu0 0
        %1271 = vmatpush1.bf16.msra.mxu0 0
        %1272 = vmatprep.subr.bf16.mxu0 0
        %1273 = vmatpush1.bf16.msra.mxu0 0
        %1274 = vmatprep.subr.bf16.mxu0 0
        %1275 = vmatpush1.bf16.msra.mxu0 0
        %1276 = vmatprep.subr.bf16.mxu0 0
        %1277 = vmatpush1.bf16.msra.mxu0 0
        %1278 = vmatprep.subr.bf16.mxu0 0
        %1279 = vmatpush1.bf16.msra.mxu0 0
        %1280 = vmatprep.subr.bf16.mxu0 0
        %1281 = vmatpush1.bf16.msra.mxu0 0
        %1282 = vmatprep.subr.bf16.mxu0 0
        %1283 = vmatpush1.bf16.msra.mxu0 0
        %1284 = vmatprep.mubr.bf16.mxu0 0
        %1285 = vmatmul.mubr.bf16.gmra.mrb[0].mxu0 %v1182
        %v1286 = vpop.f32.mrb[0].mxu0
        %v1287 = vadd.f32 0.0, %v1286
        %v1288 = vpop.f32.mrb[0].mxu0
        %v1289 = vpop.f32.mrb[0].mxu0
        %v1290 = vadd.f32 0.0, %v1289
        %v1291 = vpop.f32.mrb[0].mxu0
        %1292 = vmatprep.mubr.bf16.mxu0 0
        %1293 = vmatmul.mubr.bf16.gmra.mrb[0].mxu0 %v1186
        %v1294 = vpop.f32.mrb[0].mxu0
        %v1295 = vadd.f32 0.0, %v1294
        %v1296 = vpop.f32.mrb[0].mxu0
        %v1297 = vpop.f32.mrb[0].mxu0
        %v1298 = vadd.f32 0.0, %v1297
        %v1299 = vpop.f32.mrb[0].mxu0
        %1300 = vmatprep.mubr.bf16.mxu0 0
        %1301 = vmatmul.mubr.bf16.gmra.mrb[0].mxu0 %v1190
        %v1302 = vpop.f32.mrb[0].mxu0
        %v1303 = vadd.f32 0.0, %v1302
        %v1304 = vpop.f32.mrb[0].mxu0
        %v1305 = vpop.f32.mrb[0].mxu0
        %v1306 = vadd.f32 0.0, %v1305
        %v1307 = vpop.f32.mrb[0].mxu0
        %1308 = vmatprep.mubr.bf16.mxu0 0
        %1309 = vmatmul.mubr.bf16.gmra.mrb[0].mxu0 %v1199
        %v1310 = vpop.f32.mrb[0].mxu0
        %v1311 = vadd.f32 0.0, %v1310
        %v1312 = vpop.f32.mrb[0].mxu0
        %v1313 = vpop.f32.mrb[0].mxu0
        %v1314 = vadd.f32 0.0, %v1313
        %v1315 = vpop.f32.mrb[0].mxu0
        %1316 = vdwg.mxu0
        %v1317 = vadd.f32 %v1141, %v1287
        %v1318 = vadd.f32 %v1142, %v1290
        %v1319 = vadd.f32 %v1143, %v1295
        %v1320 = vadd.f32 %v1144, %v1298
        %v1321 = vadd.f32 %v1145, %v1303
        %v1322 = vadd.f32 %v1146, %v1306
        %v1323 = vadd.f32 %v1147, %v1311
        %v1324 = vadd.f32 %v1148, %v1314
        %v1325 = vld [vmem:[%s239 + $0x8] sm:$0x8]
        %v1326 = vld [vmem:[%s239 + $0xc] sm:$0xf]
        %v1327 = vld [vmem:[%s239 + $0x10] sm:$0xf]
        %v1328 = vld [vmem:[%s239 + $0x14] sm:$0xf]
        %v1329 = vld [vmem:[%s239 + $0x18] sm:$0xf]
        %v1330 = vld [vmem:[%s239 + $0x1c] sm:$0xf]
        %v1331 = vld [vmem:[%s239 + $0x20] sm:$0xf]
        %v1332 = vld [vmem:[%s239 + $0x24] sm:$0xf]
        %v1333 = vld [vmem:[%s239 + $0x28] sm:$0x7]
        %s1334 = scalar_lea.vmem [#allocation5], 384
        %v1335 = vld [vmem:[%s1334] sm:$0xf]
        %v1336 = vld [vmem:[%s1334 + $0x4] sm:$0xf]
        %v1337 = vld [vmem:[%s1334 + $0x8] sm:$0xf]
        %v1338 = vld [vmem:[%s1334 + $0xc] sm:$0xf]
        %v1339 = vld [vmem:[%s1334 + $0x10] sm:$0xf]
        %v1340 = vld [vmem:[%s1334 + $0x14] sm:$0xf]
        %v1341 = vld [vmem:[%s1334 + $0x18] sm:$0xf]
        %v1342 = vld [vmem:[%s1334 + $0x1c] sm:$0xf]
        %v1343 = vld [vmem:[%s1334 + $0x20] sm:$0xf]
        %v1344 = vld [vmem:[%s1334 + $0x24] sm:$0xf]
        %v1345 = vld [vmem:[%s1334 + $0x28] sm:$0xf]
        %v1346 = vld [vmem:[%s1334 + $0x2c] sm:$0xf]
        %v1347 = vld [vmem:[%s1334 + $0x30] sm:$0xf]
        %v1348 = vld [vmem:[%s1334 + $0x34] sm:$0xf]
        %v1349 = vld [vmem:[%s1334 + $0x38] sm:$0xf]
        %v1350 = vld [vmem:[%s1334 + $0x3c] sm:$0xf]
        %v1360 = vunpack.c.l.b16 %v1325
        %v1361 = vunpack.c.l.b16 %v1326
        %v1362 = vunpack.c.l.b16 %v1327
        %v1363 = vunpack.c.l.b16 %v1328
        %v1364 = vunpack.c.l.b16 %v1329
        %v1365 = vunpack.c.l.b16 %v1330
        %v1366 = vunpack.c.l.b16 %v1331
        %v1367 = vunpack.c.l.b16 %v1332
        %v1368 = vunpack.c.l.b16 %v1333
        %v1369 = vpack.c.b16 %v1361, %v1360
        %v1370 = vpack.c.b16 %v1363, %v1362
        %v1371 = vpack.c.b16 %v1365, %v1364
        %v1372 = vpack.c.b16 %v1367, %v1366
        %v1373 = vpack.c.b16 %v1368, %v1368
        %vm1374 = vcmask 1044480
        %v1375 = vrot.slane %v1369, 3
        %v1376 = vrot.slane %v1370, 3
        %v1377 = vsel %vm1374, %v1375, %v1376
        %v1378 = vrot.slane %v1371, 3
        %v1379 = vsel %vm1374, %v1376, %v1378
        %v1380 = vrot.slane %v1372, 3
        %v1381 = vsel %vm1374, %v1378, %v1380
        %v1382 = vrot.slane %v1373, 3
        %v1383 = vsel %vm1374, %v1380, %v1382
        %v1404 = vunpack.c.l.b16 %v1335
        %v1405 = vunpack.c.l.b16 %v1336
        %v1406 = vunpack.c.l.b16 %v1337
        %v1407 = vunpack.c.l.b16 %v1338
        %v1408 = vunpack.c.l.b16 %v1339
        %v1409 = vunpack.c.l.b16 %v1340
        %v1410 = vunpack.c.l.b16 %v1341
        %v1411 = vunpack.c.l.b16 %v1342
        %v1412 = vunpack.c.l.b16 %v1343
        %v1413 = vunpack.c.l.b16 %v1344
        %v1414 = vunpack.c.l.b16 %v1345
        %v1415 = vunpack.c.l.b16 %v1346
        %v1416 = vunpack.c.l.b16 %v1347
        %v1417 = vunpack.c.l.b16 %v1348
        %v1418 = vunpack.c.l.b16 %v1349
        %v1419 = vunpack.c.l.b16 %v1350
        %v1420 = vpack.c.b16 %v1405, %v1404
        %v1421 = vpack.c.b16 %v1407, %v1406
        %v1422 = vpack.c.b16 %v1409, %v1408
        %v1423 = vpack.c.b16 %v1411, %v1410
        %v1424 = vpack.c.b16 %v1413, %v1412
        %v1425 = vpack.c.b16 %v1415, %v1414
        %v1426 = vpack.c.b16 %v1417, %v1416
        %v1427 = vpack.c.b16 %v1419, %v1418
        %1436 = vmatprep.subr.bf16.mxu0 0
        %1437 = vmatpush1.bf16.msra.mxu0 %v1420
        %1438 = vmatprep.subr.bf16.mxu0 0
        %1439 = vmatpush1.bf16.msra.mxu0 %v1421
        %1440 = vmatprep.subr.bf16.mxu0 0
        %1441 = vmatpush1.bf16.msra.mxu0 %v1422
        %1442 = vmatprep.subr.bf16.mxu0 0
        %1443 = vmatpush1.bf16.msra.mxu0 %v1423
        %1444 = vmatprep.subr.bf16.mxu0 0
        %1445 = vmatpush1.bf16.msra.mxu0 %v1424
        %1446 = vmatprep.subr.bf16.mxu0 0
        %1447 = vmatpush1.bf16.msra.mxu0 %v1425
        %1448 = vmatprep.subr.bf16.mxu0 0
        %1449 = vmatpush1.bf16.msra.mxu0 %v1426
        %1450 = vmatprep.subr.bf16.mxu0 0
        %1451 = vmatpush1.bf16.msra.mxu0 %v1427
        %1452 = vmatprep.subr.bf16.mxu0 0
        %1453 = vmatpush1.bf16.msra.mxu0 0
        %1454 = vmatprep.subr.bf16.mxu0 0
        %1455 = vmatpush1.bf16.msra.mxu0 0
        %1456 = vmatprep.subr.bf16.mxu0 0
        %1457 = vmatpush1.bf16.msra.mxu0 0
        %1458 = vmatprep.subr.bf16.mxu0 0
        %1459 = vmatpush1.bf16.msra.mxu0 0
        %1460 = vmatprep.subr.bf16.mxu0 0
        %1461 = vmatpush1.bf16.msra.mxu0 0
        %1462 = vmatprep.subr.bf16.mxu0 0
        %1463 = vmatpush1.bf16.msra.mxu0 0
        %1464 = vmatprep.subr.bf16.mxu0 0
        %1465 = vmatpush1.bf16.msra.mxu0 0
        %1466 = vmatprep.subr.bf16.mxu0 0
        %1467 = vmatpush1.bf16.msra.mxu0 0
        %1468 = vmatprep.mubr.bf16.mxu0 0
        %1469 = vmatmul.mubr.bf16.gmra.mrb[0].mxu0 %v1377
        %v1470 = vpop.f32.mrb[0].mxu0
        %v1471 = vadd.f32 0.0, %v1470
        %v1472 = vpop.f32.mrb[0].mxu0
        %v1473 = vpop.f32.mrb[0].mxu0
        %v1474 = vadd.f32 0.0, %v1473
        %v1475 = vpop.f32.mrb[0].mxu0
        %1476 = vmatprep.mubr.bf16.mxu0 0
        %1477 = vmatmul.mubr.bf16.gmra.mrb[0].mxu0 %v1379
        %v1478 = vpop.f32.mrb[0].mxu0
        %v1479 = vadd.f32 0.0, %v1478
        %v1480 = vpop.f32.mrb[0].mxu0
        %v1481 = vpop.f32.mrb[0].mxu0
        %v1482 = vadd.f32 0.0, %v1481
        %v1483 = vpop.f32.mrb[0].mxu0
        %1484 = vmatprep.mubr.bf16.mxu0 0
        %1485 = vmatmul.mubr.bf16.gmra.mrb[0].mxu0 %v1381
        %v1486 = vpop.f32.mrb[0].mxu0
        %v1487 = vadd.f32 0.0, %v1486
        %v1488 = vpop.f32.mrb[0].mxu0
        %v1489 = vpop.f32.mrb[0].mxu0
        %v1490 = vadd.f32 0.0, %v1489
        %v1491 = vpop.f32.mrb[0].mxu0
        %1492 = vmatprep.mubr.bf16.mxu0 0
        %1493 = vmatmul.mubr.bf16.gmra.mrb[0].mxu0 %v1383
        %v1494 = vpop.f32.mrb[0].mxu0
        %v1495 = vadd.f32 0.0, %v1494
        %v1496 = vpop.f32.mrb[0].mxu0
        %v1497 = vpop.f32.mrb[0].mxu0
        %v1498 = vadd.f32 0.0, %v1497
        %v1499 = vpop.f32.mrb[0].mxu0
        %1500 = vdwg.mxu0
        %v1501 = vadd.f32 %v1317, %v1471
        %v1502 = vadd.f32 %v1318, %v1474
        %v1503 = vadd.f32 %v1319, %v1479
        %v1504 = vadd.f32 %v1320, %v1482
        %v1505 = vadd.f32 %v1321, %v1487
        %v1506 = vadd.f32 %v1322, %v1490
        %v1507 = vadd.f32 %v1323, %v1495
        %v1508 = vadd.f32 %v1324, %v1498
        %v1509 = vld [vmem:[%s239 + $0x28] sm:$0xf]
        %s1510 = scalar_lea.vmem [#allocation5], 448
        %v1511 = vld [vmem:[%s1510] sm:$0xf]
        %v1512 = vld [vmem:[%s1510 + $0x4] sm:$0xf]
        %v1513 = vld [vmem:[%s1510 + $0x8] sm:$0xf]
        %v1514 = vld [vmem:[%s1510 + $0xc] sm:$0xf]
        %v1515 = vld [vmem:[%s1510 + $0x10] sm:$0xf]
        %v1516 = vld [vmem:[%s1510 + $0x14] sm:$0xf]
        %v1517 = vld [vmem:[%s1510 + $0x18] sm:$0xf]
        %v1518 = vld [vmem:[%s1510 + $0x1c] sm:$0xf]
        %v1519 = vld [vmem:[%s1510 + $0x20] sm:$0xf]
        %v1520 = vld [vmem:[%s1510 + $0x24] sm:$0xf]
        %v1521 = vld [vmem:[%s1510 + $0x28] sm:$0xf]
        %v1522 = vld [vmem:[%s1510 + $0x2c] sm:$0xf]
        %v1523 = vld [vmem:[%s1510 + $0x30] sm:$0xf]
        %v1524 = vld [vmem:[%s1510 + $0x34] sm:$0xf]
        %v1525 = vld [vmem:[%s1510 + $0x38] sm:$0xf]
        %v1526 = vld [vmem:[%s1510 + $0x3c] sm:$0xf]
        %v1528 = vunpack.c.l.b16 %v1509
        %v1529 = vpack.c.b16 %v1528, %v1528
        %vm1530 = vsmask.f32 4352
        %v1532 = vshrl.u32 %v1369, 16
        %v1534 = vrot.slane %v1532, 3
        %v1535 = vshll.u32 %v1369, 16
        %v1537 = vrot.slane %v1535, 4
        %v1538 = vor.u32 %v1534, %v1537
        %v1540 = vshrl.u32 %v1370, 16
        %v1542 = vrot.slane %v1540, 3
        %v1543 = vshll.u32 %v1370, 16
        %v1545 = vrot.slane %v1543, 4
        %v1546 = vor.u32 %v1542, %v1545
        %v1547 = vsel %vm1530, %v1538, %v1546
        %v1549 = vshrl.u32 %v1371, 16
        %v1551 = vrot.slane %v1549, 3
        %v1552 = vshll.u32 %v1371, 16
        %v1554 = vrot.slane %v1552, 4
        %v1555 = vor.u32 %v1551, %v1554
        %v1556 = vsel %vm1530, %v1546, %v1555
        %v1558 = vshrl.u32 %v1372, 16
        %v1560 = vrot.slane %v1558, 3
        %v1561 = vshll.u32 %v1372, 16
        %v1563 = vrot.slane %v1561, 4
        %v1564 = vor.u32 %v1560, %v1563
        %v1565 = vsel %vm1530, %v1555, %v1564
        %v1567 = vshrl.u32 %v1529, 16
        %v1569 = vrot.slane %v1567, 3
        %v1570 = vshll.u32 %v1529, 16
        %v1572 = vrot.slane %v1570, 4
        %v1573 = vor.u32 %v1569, %v1572
        %v1574 = vsel %vm1530, %v1564, %v1573
        %v1595 = vunpack.c.l.b16 %v1511
        %v1596 = vunpack.c.l.b16 %v1512
        %v1597 = vunpack.c.l.b16 %v1513
        %v1598 = vunpack.c.l.b16 %v1514
        %v1599 = vunpack.c.l.b16 %v1515
        %v1600 = vunpack.c.l.b16 %v1516
        %v1601 = vunpack.c.l.b16 %v1517
        %v1602 = vunpack.c.l.b16 %v1518
        %v1603 = vunpack.c.l.b16 %v1519
        %v1604 = vunpack.c.l.b16 %v1520
        %v1605 = vunpack.c.l.b16 %v1521
        %v1606 = vunpack.c.l.b16 %v1522
        %v1607 = vunpack.c.l.b16 %v1523
        %v1608 = vunpack.c.l.b16 %v1524
        %v1609 = vunpack.c.l.b16 %v1525
        %v1610 = vunpack.c.l.b16 %v1526
        %v1611 = vpack.c.b16 %v1596, %v1595
        %v1612 = vpack.c.b16 %v1598, %v1597
        %v1613 = vpack.c.b16 %v1600, %v1599
        %v1614 = vpack.c.b16 %v1602, %v1601
        %v1615 = vpack.c.b16 %v1604, %v1603
        %v1616 = vpack.c.b16 %v1606, %v1605
        %v1617 = vpack.c.b16 %v1608, %v1607
        %v1618 = vpack.c.b16 %v1610, %v1609
        %1627 = vmatprep.subr.bf16.mxu0 0
        %1628 = vmatpush1.bf16.msra.mxu0 %v1611
        %1629 = vmatprep.subr.bf16.mxu0 0
        %1630 = vmatpush1.bf16.msra.mxu0 %v1612
        %1631 = vmatprep.subr.bf16.mxu0 0
        %1632 = vmatpush1.bf16.msra.mxu0 %v1613
        %1633 = vmatprep.subr.bf16.mxu0 0
        %1634 = vmatpush1.bf16.msra.mxu0 %v1614
        %1635 = vmatprep.subr.bf16.mxu0 0
        %1636 = vmatpush1.bf16.msra.mxu0 %v1615
        %1637 = vmatprep.subr.bf16.mxu0 0
        %1638 = vmatpush1.bf16.msra.mxu0 %v1616
        %1639 = vmatprep.subr.bf16.mxu0 0
        %1640 = vmatpush1.bf16.msra.mxu0 %v1617
        %1641 = vmatprep.subr.bf16.mxu0 0
        %1642 = vmatpush1.bf16.msra.mxu0 %v1618
        %1643 = vmatprep.subr.bf16.mxu0 0
        %1644 = vmatpush1.bf16.msra.mxu0 0
        %1645 = vmatprep.subr.bf16.mxu0 0
        %1646 = vmatpush1.bf16.msra.mxu0 0
        %1647 = vmatprep.subr.bf16.mxu0 0
        %1648 = vmatpush1.bf16.msra.mxu0 0
        %1649 = vmatprep.subr.bf16.mxu0 0
        %1650 = vmatpush1.bf16.msra.mxu0 0
        %1651 = vmatprep.subr.bf16.mxu0 0
        %1652 = vmatpush1.bf16.msra.mxu0 0
        %1653 = vmatprep.subr.bf16.mxu0 0
        %1654 = vmatpush1.bf16.msra.mxu0 0
        %1655 = vmatprep.subr.bf16.mxu0 0
        %1656 = vmatpush1.bf16.msra.mxu0 0
        %1657 = vmatprep.subr.bf16.mxu0 0
        %1658 = vmatpush1.bf16.msra.mxu0 0
        %1659 = vmatprep.mubr.bf16.mxu0 0
        %1660 = vmatmul.mubr.bf16.gmra.mrb[0].mxu0 %v1547
        %v1661 = vpop.f32.mrb[0].mxu0
        %v1662 = vadd.f32 0.0, %v1661
        %v1663 = vpop.f32.mrb[0].mxu0
        %v1664 = vpop.f32.mrb[0].mxu0
        %v1665 = vadd.f32 0.0, %v1664
        %v1666 = vpop.f32.mrb[0].mxu0
        %1667 = vmatprep.mubr.bf16.mxu0 0
        %1668 = vmatmul.mubr.bf16.gmra.mrb[0].mxu0 %v1556
        %v1669 = vpop.f32.mrb[0].mxu0
        %v1670 = vadd.f32 0.0, %v1669
        %v1671 = vpop.f32.mrb[0].mxu0
        %v1672 = vpop.f32.mrb[0].mxu0
        %v1673 = vadd.f32 0.0, %v1672
        %v1674 = vpop.f32.mrb[0].mxu0
        %1675 = vmatprep.mubr.bf16.mxu0 0
        %1676 = vmatmul.mubr.bf16.gmra.mrb[0].mxu0 %v1565
        %v1677 = vpop.f32.mrb[0].mxu0
        %v1678 = vadd.f32 0.0, %v1677
        %v1679 = vpop.f32.mrb[0].mxu0
        %v1680 = vpop.f32.mrb[0].mxu0
        %v1681 = vadd.f32 0.0, %v1680
        %v1682 = vpop.f32.mrb[0].mxu0
        %1683 = vmatprep.mubr.bf16.mxu0 0
        %1684 = vmatmul.mubr.bf16.gmra.mrb[0].mxu0 %v1574
        %v1685 = vpop.f32.mrb[0].mxu0
        %v1686 = vadd.f32 0.0, %v1685
        %v1687 = vpop.f32.mrb[0].mxu0
        %v1688 = vpop.f32.mrb[0].mxu0
        %v1689 = vadd.f32 0.0, %v1688
        %v1690 = vpop.f32.mrb[0].mxu0
        %1691 = vdwg.mxu0
        %v1692 = vadd.f32 %v1501, %v1662
        %v1693 = vadd.f32 %v1502, %v1665
        %v1694 = vadd.f32 %v1503, %v1670
        %v1695 = vadd.f32 %v1504, %v1673
        %v1696 = vadd.f32 %v1505, %v1678
        %v1697 = vadd.f32 %v1506, %v1681
        %v1698 = vadd.f32 %v1507, %v1686
        %v1699 = vadd.f32 %v1508, %v1689
        %s1700 = scalar_lea.vmem [#allocation5], 512
        %v1701 = vld [vmem:[%s1700] sm:$0xf]
        %v1702 = vld [vmem:[%s1700 + $0x4] sm:$0xf]
        %v1703 = vld [vmem:[%s1700 + $0x8] sm:$0xf]
        %v1704 = vld [vmem:[%s1700 + $0xc] sm:$0xf]
        %v1705 = vld [vmem:[%s1700 + $0x10] sm:$0xf]
        %v1706 = vld [vmem:[%s1700 + $0x14] sm:$0xf]
        %v1707 = vld [vmem:[%s1700 + $0x18] sm:$0xf]
        %v1708 = vld [vmem:[%s1700 + $0x1c] sm:$0xf]
        %v1709 = vld [vmem:[%s1700 + $0x20] sm:$0xf]
        %v1710 = vld [vmem:[%s1700 + $0x24] sm:$0xf]
        %v1711 = vld [vmem:[%s1700 + $0x28] sm:$0xf]
        %v1712 = vld [vmem:[%s1700 + $0x2c] sm:$0xf]
        %v1713 = vld [vmem:[%s1700 + $0x30] sm:$0xf]
        %v1714 = vld [vmem:[%s1700 + $0x34] sm:$0xf]
        %v1715 = vld [vmem:[%s1700 + $0x38] sm:$0xf]
        %v1716 = vld [vmem:[%s1700 + $0x3c] sm:$0xf]
        %v1717 = vpack.c.b16 %v1362, %v1361
        %v1718 = vpack.c.b16 %v1364, %v1363
        %v1719 = vpack.c.b16 %v1366, %v1365
        %v1720 = vpack.c.b16 %v1528, %v1367
        %v1741 = vunpack.c.l.b16 %v1701
        %v1742 = vunpack.c.l.b16 %v1702
        %v1743 = vunpack.c.l.b16 %v1703
        %v1744 = vunpack.c.l.b16 %v1704
        %v1745 = vunpack.c.l.b16 %v1705
        %v1746 = vunpack.c.l.b16 %v1706
        %v1747 = vunpack.c.l.b16 %v1707
        %v1748 = vunpack.c.l.b16 %v1708
        %v1749 = vunpack.c.l.b16 %v1709
        %v1750 = vunpack.c.l.b16 %v1710
        %v1751 = vunpack.c.l.b16 %v1711
        %v1752 = vunpack.c.l.b16 %v1712
        %v1753 = vunpack.c.l.b16 %v1713
        %v1754 = vunpack.c.l.b16 %v1714
        %v1755 = vunpack.c.l.b16 %v1715
        %v1756 = vunpack.c.l.b16 %v1716
        %v1757 = vpack.c.b16 %v1742, %v1741
        %v1758 = vpack.c.b16 %v1744, %v1743
        %v1759 = vpack.c.b16 %v1746, %v1745
        %v1760 = vpack.c.b16 %v1748, %v1747
        %v1761 = vpack.c.b16 %v1750, %v1749
        %v1762 = vpack.c.b16 %v1752, %v1751
        %v1763 = vpack.c.b16 %v1754, %v1753
        %v1764 = vpack.c.b16 %v1756, %v1755
        %1773 = vmatprep.subr.bf16.mxu0 0
        %1774 = vmatpush1.bf16.msra.mxu0 %v1757
        %1775 = vmatprep.subr.bf16.mxu0 0
        %1776 = vmatpush1.bf16.msra.mxu0 %v1758
        %1777 = vmatprep.subr.bf16.mxu0 0
        %1778 = vmatpush1.bf16.msra.mxu0 %v1759
        %1779 = vmatprep.subr.bf16.mxu0 0
        %1780 = vmatpush1.bf16.msra.mxu0 %v1760
        %1781 = vmatprep.subr.bf16.mxu0 0
        %1782 = vmatpush1.bf16.msra.mxu0 %v1761
        %1783 = vmatprep.subr.bf16.mxu0 0
        %1784 = vmatpush1.bf16.msra.mxu0 %v1762
        %1785 = vmatprep.subr.bf16.mxu0 0
        %1786 = vmatpush1.bf16.msra.mxu0 %v1763
        %1787 = vmatprep.subr.bf16.mxu0 0
        %1788 = vmatpush1.bf16.msra.mxu0 %v1764
        %1789 = vmatprep.subr.bf16.mxu0 0
        %1790 = vmatpush1.bf16.msra.mxu0 0
        %1791 = vmatprep.subr.bf16.mxu0 0
        %1792 = vmatpush1.bf16.msra.mxu0 0
        %1793 = vmatprep.subr.bf16.mxu0 0
        %1794 = vmatpush1.bf16.msra.mxu0 0
        %1795 = vmatprep.subr.bf16.mxu0 0
        %1796 = vmatpush1.bf16.msra.mxu0 0
        %1797 = vmatprep.subr.bf16.mxu0 0
        %1798 = vmatpush1.bf16.msra.mxu0 0
        %1799 = vmatprep.subr.bf16.mxu0 0
        %1800 = vmatpush1.bf16.msra.mxu0 0
        %1801 = vmatprep.subr.bf16.mxu0 0
        %1802 = vmatpush1.bf16.msra.mxu0 0
        %1803 = vmatprep.subr.bf16.mxu0 0
        %1804 = vmatpush1.bf16.msra.mxu0 0
        %1805 = vmatprep.mubr.bf16.mxu0 0
        %1806 = vmatmul.mubr.bf16.gmra.mrb[0].mxu0 %v1717
        %v1807 = vpop.f32.mrb[0].mxu0
        %v1808 = vadd.f32 0.0, %v1807
        %v1809 = vpop.f32.mrb[0].mxu0
        %v1810 = vpop.f32.mrb[0].mxu0
        %v1811 = vadd.f32 0.0, %v1810
        %v1812 = vpop.f32.mrb[0].mxu0
        %1813 = vmatprep.mubr.bf16.mxu0 0
        %1814 = vmatmul.mubr.bf16.gmra.mrb[0].mxu0 %v1718
        %v1815 = vpop.f32.mrb[0].mxu0
        %v1816 = vadd.f32 0.0, %v1815
        %v1817 = vpop.f32.mrb[0].mxu0
        %v1818 = vpop.f32.mrb[0].mxu0
        %v1819 = vadd.f32 0.0, %v1818
        %v1820 = vpop.f32.mrb[0].mxu0
        %1821 = vmatprep.mubr.bf16.mxu0 0
        %1822 = vmatmul.mubr.bf16.gmra.mrb[0].mxu0 %v1719
        %v1823 = vpop.f32.mrb[0].mxu0
        %v1824 = vadd.f32 0.0, %v1823
        %v1825 = vpop.f32.mrb[0].mxu0
        %v1826 = vpop.f32.mrb[0].mxu0
        %v1827 = vadd.f32 0.0, %v1826
        %v1828 = vpop.f32.mrb[0].mxu0
        %1829 = vmatprep.mubr.bf16.mxu0 0
        %1830 = vmatmul.mubr.bf16.gmra.mrb[0].mxu0 %v1720
        %v1831 = vpop.f32.mrb[0].mxu0
        %v1832 = vadd.f32 0.0, %v1831
        %v1833 = vpop.f32.mrb[0].mxu0
        %v1834 = vpop.f32.mrb[0].mxu0
        %v1835 = vadd.f32 0.0, %v1834
        %v1836 = vpop.f32.mrb[0].mxu0
        %1837 = vdwg.mxu0
        %v1838 = vadd.f32 %v1692, %v1808
        %v1839 = vadd.f32 %v1693, %v1811
        %v1840 = vadd.f32 %v1694, %v1816
        %v1841 = vadd.f32 %v1695, %v1819
        %v1842 = vadd.f32 %v1696, %v1824
        %v1843 = vadd.f32 %v1697, %v1827
        %v1844 = vadd.f32 %v1698, %v1832
        %v1845 = vadd.f32 %v1699, %v1835
        %v1846 = vld [vmem:[%s276] sm:$0x1]
        %v1848 = vlaneseq
        %v1849 = vshrl.u32 %v1848, 7
        %v1850 = vsub.s32 0, %v1849
        %v1851 = vrot.slane %v1846, %v1850
        %v1853 = vmul.f32 %v1838, %v1851
        %v1854 = vmul.f32 %v1839, %v1851
        %v1855 = vmul.f32 %v1840, %v1851
        %v1856 = vmul.f32 %v1841, %v1851
        %v1857 = vmul.f32 %v1842, %v1851
        %v1858 = vmul.f32 %v1843, %v1851
        %v1859 = vmul.f32 %v1844, %v1851
        %v1860 = vmul.f32 %v1845, %v1851
        %v1861 = vld [vmem:[%s279] sm:$0x1]
        %v1863 = vlaneseq
        %v1864 = vshrl.u32 %v1863, 7
        %v1865 = vsub.s32 0, %v1864
        %v1866 = vrot.slane %v1861, %v1865
        %v1868 = vadd.f32 %v1853, %v1866
        %v1869 = vadd.f32 %v1854, %v1866
        %v1870 = vadd.f32 %v1855, %v1866
        %v1871 = vadd.f32 %v1856, %v1866
        %v1872 = vadd.f32 %v1857, %v1866
        %v1873 = vadd.f32 %v1858, %v1866
        %v1874 = vadd.f32 %v1859, %v1866
        %v1875 = vadd.f32 %v1860, %v1866
        %v1876 = vmax.f32 %v1868, 0.0
        %v1877 = vmax.f32 %v1869, 0.0
        %v1878 = vmax.f32 %v1870, 0.0
        %v1879 = vmax.f32 %v1871, 0.0
        %v1880 = vmax.f32 %v1872, 0.0
        %v1881 = vmax.f32 %v1873, 0.0
        %v1882 = vmax.f32 %v1874, 0.0
        %v1883 = vmax.f32 %v1875, 0.0
        %v1884 = vpack.c.bf16 %v1877, %v1876
        %v1885 = vpack.c.bf16 %v1879, %v1878
        %v1886 = vpack.c.bf16 %v1881, %v1880
        %v1887 = vpack.c.bf16 %v1883, %v1882
        %v1892 = vunpack.c.l.b16 %v1884
        %v1893 = vunpack.c.h.b16 %v1884
        %v1894 = vunpack.c.l.b16 %v1885
        %v1895 = vunpack.c.h.b16 %v1885
        %v1896 = vunpack.c.l.b16 %v1886
        %v1897 = vunpack.c.h.b16 %v1886
        %v1898 = vunpack.c.l.b16 %v1887
        %v1899 = vunpack.c.h.b16 %v1887
        %v1900 = vpack.c.b16 %v1892, %v1892
        %v1901 = vpack.c.b16 %v1893, %v1893
        %v1902 = vpack.c.b16 %v1894, %v1894
        %v1903 = vpack.c.b16 %v1895, %v1895
        %v1904 = vpack.c.b16 %v1896, %v1896
        %v1905 = vpack.c.b16 %v1897, %v1897
        %v1906 = vpack.c.b16 %v1898, %v1898
        %v1907 = vpack.c.b16 %v1899, %v1899
        %1916 = vst [vmem:[%s273] sm:$0xf] %v1900
        %1917 = vst [vmem:[%s273 + $0x4] sm:$0xf] %v1901
        %1918 = vst [vmem:[%s273 + $0x8] sm:$0xf] %v1902
        %1919 = vst [vmem:[%s273 + $0xc] sm:$0xf] %v1903
        %1920 = vst [vmem:[%s273 + $0x10] sm:$0xf] %v1904
        %1921 = vst [vmem:[%s273 + $0x14] sm:$0xf] %v1905
        %1922 = vst [vmem:[%s273 + $0x18] sm:$0xf] %v1906
        %1923 = vst [vmem:[%s273 + $0x1c] sm:$0xf] %v1907
        %s1924 = sand.u32 %s148, 1
        %s1925 = scalar_lea.sflag [#allocation4], %s1924
        %s1926 = sand.u32 %s148, 1
        %s1927 = smul.addr %s1926, 32
        %s1928 = scalar_lea.vmem [#allocation7], %s1927
        // Predicated region
        $region45: #{tpu_custom_call.1} parent=35 // pred_check
          %p1929 = pneg %p158
        $region46: #{tpu_custom_call.1} parent=35 // pred_check_branch
          %1931 = sbr.rel (%p1929) target = $region48
        $region47: #{tpu_custom_call.1} parent=35 // pred_region
          %s1932 = smul.u32 8, %s26
          %s1934 = ssub.s32 512, 512
          %1935 = vsyncadd %s1925, %s1934
          %s1936 = sadd.s32 %s27, %s1932
          %s1937 = smul.addr %s1936, 64
          %s1938 = scalar_lea.hbm %s4, %s1937
          %s1939 = sshll.u32 %s1928, 4
          %s1940 = int_to_ptr.vmem [resolvable:$true] %s1939
          %1945 = dma.vmem_to_hbm [thread:$0]  %s1940, 512, %s1938, %s1925, 64, 64, 4
        $region48: #{tpu_custom_call.1} parent=35 // pred_fallthru
          _
      $region36: #{tpu_custom_call.1} parent=5 // pred_fallthru
        _
      %p1946 = scmp.le.s32.totalorder 2, %s17
      // Predicated region
      $region49: #{tpu_custom_call.1} parent=5 // pred_check
        %p1947 = pneg %p1946
      $region50: #{tpu_custom_call.1} parent=5 // pred_check_branch
        %1949 = sbr.rel (%p1947) target = $region52
      $region51: #{tpu_custom_call.1} parent=5 // pred_region
        %s1950 = ssub.s32 %s17, 2
        // Predicated region
        $region53: #{tpu_custom_call.1} parent=51 // pred_check
          %p1951 = pneg %p164
        $region54: #{tpu_custom_call.1} parent=51 // pred_check_branch
          %1953 = sbr.rel (%p1951) target = $region56
        $region55: #{tpu_custom_call.1} parent=51 // pred_region
          %s1954 = sand.u32 %s149, 1
          %s1955 = scalar_lea.sflag [#allocation4], %s1954
          %s1956 = sand.u32 %s149, 1
          %s1957 = smul.addr %s1956, 32
          %s1958 = scalar_lea.vmem [#allocation7], %s1957
          %1959 = dma.done %s1955, 512
        $region56: #{tpu_custom_call.1} parent=51 // pred_fallthru
          _
      $region52: #{tpu_custom_call.1} parent=5 // pred_fallthru
        _
    $region6: #{tpu_custom_call.1} parent=1 // loop_footer
      %s21 = sadd.s32 1, %s17
    $region7: #{tpu_custom_call.1} parent=1 // loop_footer_branch
      %16 = sbr.rel target = $region3
    $region8: #{tpu_custom_call.1} parent=1 // loop_exit
      _
    %1960 = vsyncpa [#allocation3], 1
    %s1961 = scalar_lea.sflag [#allocation3], 1
    %1962 = vsyncpa %s1961, 1
    %1963 = vsyncpa [#allocation6], 1
    %1964 = vsyncpa [#allocation4], 1
    %s1965 = scalar_lea.sflag [#allocation4], 1
    %1966 = vsyncpa %s1965, 1

</llo_original>
